<compile_context>
chip_gen: v6e
topology: v6e:2x2x1
jax: 0.10.0
libtpu: 0.0.40
codegen_flags: <defaults>
</compile_context>

<pallas_src>
import functools

import jax
import jax.numpy as jnp
from jax.experimental import pallas as pl
from jax.experimental.pallas import tpu as pltpu


def _round_up(n: int, m: int) -> int:
    return ((n + m - 1) // m) * m


def _mlp_kernel(x_ref, w1_ref, w2_ref, w3_ref, b_ref, out_ref, *, h1, h2, c, c_sub):
    """x:(tb,F) bf16; w*: bf16 (BN pre-folded); b:(3,Wmax) f32; out:(c_sub,tb) f32."""
    b = b_ref[...]  # (3, Wmax) f32, one small load

    # layer 1: Linear -> ReLU          (Dropout = identity; BN folded into W2/b2)
    h = jnp.dot(x_ref[...], w1_ref[...], preferred_element_type=jnp.float32)
    h = jnp.maximum(h + b[0:1, :h1], 0.0)

    # layer 2: Linear (BN-folded) -> ReLU
    h = jnp.dot(h.astype(jnp.bfloat16), w2_ref[...],
                preferred_element_type=jnp.float32)
    h = jnp.maximum(h + b[1:2, :h2], 0.0)

    # output layer: Linear (BN-folded), stored class-major (classes on sublanes,
    # batch on lanes) so the HBM writeback is only the real classes.
    o = jnp.dot(h.astype(jnp.bfloat16), w3_ref[...],
                preferred_element_type=jnp.float32)
    o = o + b[2:3, :c]
    out_ref[...] = o.T[:c_sub, :].astype(out_ref.dtype)


def prepare_params(params, *, lane=128):
    """Fold eval-mode BN into the following Linear, pad only the matmul N dims to 128,
    cast weights to bf16 and pack the biases into a single (3, Wmax) block."""
    (w1, b1, s2, t2, w2, b2, s3, t3, w3, b3) = params
    f_in, h1 = w1.shape
    h2 = w2.shape[1]
    n_cls = w3.shape[1]

    # (h*s + t) @ W + b  ==  h @ (diag(s)@W) + (t@W + b)   (fold applied post-ReLU)
    w2f = s2.reshape(-1, 1) * w2
    b2f = b2 + t2 @ w2
    w3f = s3.reshape(-1, 1) * w3
    b3f = b3 + t3 @ w3

    # Pad only the N (lane) dims of each matmul; K dims keep their true width.
    h1p, h2p, cp = (_round_up(d, lane) for d in (h1, h2, n_cls))
    c_sub = _round_up(n_cls, 8)  # class-major output rows (sublane multiple)

    def pad2(a, r, c):
        return jnp.pad(a, ((0, r - a.shape[0]), (0, c - a.shape[1])))

    w1p = pad2(w1, f_in, h1p).astype(jnp.bfloat16)
    w2p = pad2(w2f, h1p, h2p).astype(jnp.bfloat16)
    w3p = pad2(w3f, h2p, cp).astype(jnp.bfloat16)

    wmax = max(h1p, h2p, cp)
    biases = jnp.zeros((3, wmax), jnp.float32)
    biases = biases.at[0, :h1].set(b1[0])
    biases = biases.at[1, :h2].set(b2f[0])
    biases = biases.at[2, :n_cls].set(b3f[0])

    dims = dict(F_in=f_in, H1p=h1p, H2p=h2p, C=n_cls, Cp=cp, Csub=c_sub)
    return (w1p, w2p, w3p, biases), dims


def _vmem_capacity_bytes() -> int:
    try:
        return int(pltpu.get_tpu_info().vmem_capacity_bytes)
    except Exception:
        return 64 << 20  # conservative: v7x per-TensorCore VMEM


def _is_multi_core_chip() -> bool:
    try:
        return "v7" in jax.devices()[0].device_kind.lower()
    except Exception:
        return False


def classification_network_forward(x, prepared, dims, *, tile_b=None):
    """Fused forward pass. x: (B, input_size) float32. Returns (B, n_classes) f32."""
    w1p, w2p, w3p, biases = prepared
    B, f_in = x.shape
    assert f_in == dims["F_in"]
    h1p, h2p, cp = dims["H1p"], dims["H2p"], dims["Cp"]
    n_cls, c_sub = dims["C"], dims["Csub"]
    wmax = biases.shape[1]

    multi_core = _is_multi_core_chip()
    if tile_b is None:
        bp128 = _round_up(B, 128)
        # v7x: keep 128 rows/tile so both TensorCores get tiles (CORE_PARALLEL);
        # single-TC v5e/v6e: 256 rows/tile halves per-grid-step overhead.
        tile_b = 128 if multi_core else (256 if (bp128 >= 256 and bp128 % 256 == 0) else 128)

    bp = _round_up(B, tile_b)
    # Pad only the batch; features keep their true width (no inflated HBM->HBM pass).
    xp = jnp.pad(x.astype(jnp.bfloat16), ((0, bp - B), (0, 0)))

    grid = (bp // tile_b,)
    kernel = functools.partial(_mlp_kernel, h1=h1p, h2=h2p, c=cp, c_sub=c_sub)

    # VMEM budget: double-buffered x/out tiles + resident bf16 weights + packed biases
    # + f32 activation headroom; clamp by the actual chip's VMEM minus 25% headroom.
    weight_bytes = (f_in * h1p + h1p * h2p + h2p * cp) * 2
    vmem_bytes = (2 * (tile_b * f_in * 2 + c_sub * tile_b * 4)
                  + 2 * weight_bytes
                  + 2 * 3 * wmax * 4
                  + 4 * tile_b * max(h1p, h2p, cp) * 4)
    vmem_limit = int(min(max(2 * vmem_bytes, 16 << 20),
                         _vmem_capacity_bytes() * 3 // 4))

    def run(single_buffer_weights, core_parallel):
        def const_spec(shape):
            # Grid-constant operand: single-buffer it (halves resident weight VMEM).
            if single_buffer_weights:
                return pl.BlockSpec(shape, lambda i: (0, 0),
                                    pipeline_mode=pl.Buffered(1))
            return pl.BlockSpec(shape, lambda i: (0, 0))

        sem = (pltpu.CORE_PARALLEL,) if core_parallel else ("parallel",)
        out = pl.pallas_call(
            kernel,
            out_shape=jax.ShapeDtypeStruct((c_sub, bp), jnp.float32),
            grid_spec=pltpu.PrefetchScalarGridSpec(
                num_scalar_prefetch=0,
                grid=grid,
                in_specs=[
                    pl.BlockSpec((tile_b, f_in), lambda i: (i, 0)),  # x tile
                    const_spec((f_in, h1p)),                         # W1
                    const_spec((h1p, h2p)),                          # W2 (BN folded)
                    const_spec((h2p, cp)),                           # W3 (BN folded)
                    const_spec((3, wmax)),                           # packed biases
                ],
                out_specs=pl.BlockSpec((c_sub, tile_b), lambda i: (0, i)),
            ),
            compiler_params=pltpu.CompilerParams(
                dimension_semantics=sem,
                vmem_limit_bytes=vmem_limit),
        )(xp, w1p, w2p, w3p, biases)
        return jax.block_until_ready(out)

    try:
        out_t = run(single_buffer_weights=True, core_parallel=multi_core)
    except Exception:
        # Conservative fallback: double-buffered constants, plain "parallel" axis.
        out_t = run(single_buffer_weights=False, core_parallel=False)

    # (Csub, Bp) class-major -> (B, n_classes)
    return out_t[:n_cls, :B].T


def init_params(key, input_size, layers, n_classes):
    """Deterministic parameter init (uniform, PyTorch-Linear-like ranges).
    BN eval params are perturbed deterministically so BN is actually exercised."""
    h1, h2 = layers
    eps = 1e-5
    keys = jax.random.split(key, 6)

    def linear(k, fan_in, fan_out):
        bound = 1.0 / jnp.sqrt(fan_in)
        kw, kb = jax.random.split(k)
        w = jax.random.uniform(kw, (fan_in, fan_out), jnp.float32, -bound, bound)
        b = jax.random.uniform(kb, (1, fan_out), jnp.float32, -bound, bound)
        return w, b

    w1, b1 = linear(keys[0], input_size, h1)
    w2, b2 = linear(keys[1], h1, h2)
    w3, b3 = linear(keys[2], h2, n_classes)

    def bn(k, n):
        kg, kb, km, kv = jax.random.split(k, 4)
        gamma = 1.0 + 0.1 * jax.random.normal(kg, (1, n), jnp.float32)
        beta = 0.1 * jax.random.normal(kb, (1, n), jnp.float32)
        mean = 0.1 * jax.random.normal(km, (1, n), jnp.float32)
        var = jnp.abs(1.0 + 0.1 * jax.random.normal(kv, (1, n), jnp.float32))
        scale = gamma / jnp.sqrt(var + eps)
        shift = beta - mean * scale
        return scale, shift

    s2, t2 = bn(keys[3], h1)
    s3, t3 = bn(keys[4], h2)

    return (w1, b1, s2, t2, w2, b2, s3, t3, w3, b3)


def reference_forward(x, params):
    """Pure-JAX f32 reference of the same eval-mode forward (unfolded, unpadded)."""
    (w1, b1, s2, t2, w2, b2, s3, t3, w3, b3) = params
    h = jnp.maximum(x @ w1 + b1, 0.0) * s2 + t2
    h = jnp.maximum(h @ w2 + b2, 0.0) * s3 + t3
    return h @ w3 + b3


if __name__ == "__main__":
    # Small shapes consistent with the module (nlayers == 2 branch):
    # input_size=32, layers=[64, 32], n_classes=8. Batch 250 exercises batch padding
    # (padded to 256 -> 1x256-row tile on single-TC parts, 2x128-row tiles on v7x).
    B, INPUT_SIZE, LAYERS, N_CLASSES = 250, 32, (64, 32), 8

    key = jax.random.PRNGKey(0)
    kx, kp = jax.random.split(key)
    x = jax.random.normal(kx, (B, INPUT_SIZE), jnp.float32)
    params = init_params(kp, INPUT_SIZE, LAYERS, N_CLASSES)

    prepared, dims = prepare_params(params)
    out = classification_network_forward(x, prepared, dims)
    out = jax.block_until_ready(out)

    ref = reference_forward(x, params)
    assert out.shape == (B, N_CLASSES)
    # bf16 weights/activations with f32 accumulation vs. pure-f32 reference.
    assert jnp.allclose(out, ref, atol=3e-2, rtol=3e-2), "mismatch vs reference"

    print("KERNEL_OK")
</pallas_src>

<mosaic_0001>
module attributes {stable_mosaic.version = 11 : i64} {
  func.func @_mlp_kernel(%arg0: i32, %arg1: memref<256x32xbf16, #tpu.memory_space<vmem>>, %arg2: memref<32x128xbf16, #tpu.memory_space<vmem>>, %arg3: memref<128x128xbf16, #tpu.memory_space<vmem>>, %arg4: memref<128x128xbf16, #tpu.memory_space<vmem>>, %arg5: memref<3x128xf32, #tpu.memory_space<vmem>>, %arg6: memref<8x256xf32, #tpu.memory_space<vmem>>) attributes {dimension_semantics = [#tpu.dimension_semantics<parallel>], iteration_bounds = array<i64: 1>, scalar_prefetch = 0 : i64, scratch_operands = 0 : i64, tpu.core_type = #tpu.core_type<tc>, window_params = [{transform_indices = @transform_0, window_bounds = array<i64: 256, 32>}, {pipeline_mode = #tpu.pipeline_mode<synchronous>, transform_indices = @transform_1, window_bounds = array<i64: 32, 128>}, {pipeline_mode = #tpu.pipeline_mode<synchronous>, transform_indices = @transform_2, window_bounds = array<i64: 128, 128>}, {pipeline_mode = #tpu.pipeline_mode<synchronous>, transform_indices = @transform_3, window_bounds = array<i64: 128, 128>}, {pipeline_mode = #tpu.pipeline_mode<synchronous>, transform_indices = @transform_4, window_bounds = array<i64: 3, 128>}, {transform_indices = @transform_5, window_bounds = array<i64: 8, 256>}]} {
    %c0 = arith.constant 0 : index
    %c0_0 = arith.constant 0 : index
    %0 = vector.load %arg5[%c0, %c0_0] : memref<3x128xf32, #tpu.memory_space<vmem>>, vector<3x128xf32>
    %c0_1 = arith.constant 0 : index
    %c0_2 = arith.constant 0 : index
    %1 = vector.load %arg1[%c0_1, %c0_2] : memref<256x32xbf16, #tpu.memory_space<vmem>>, vector<256x32xbf16>
    %c0_3 = arith.constant 0 : index
    %c0_4 = arith.constant 0 : index
    %2 = vector.load %arg2[%c0_3, %c0_4] : memref<32x128xbf16, #tpu.memory_space<vmem>>, vector<32x128xbf16>
    %cst = arith.constant dense<0.000000e+00> : vector<256x128xf32>
    %3 = tpu.matmul %1, %2, %cst {dimension_numbers = #tpu.dot_dimension_numbers<[1], [0], [0], [1], [0, 0, 1, 1], [], []>} : vector<256x32xbf16>, vector<32x128xbf16>, vector<256x128xf32> -> vector<256x128xf32>
    %4 = vector.extract_strided_slice %0 {offsets = [0, 0], sizes = [1, 128], strides = [1, 1]} : vector<3x128xf32> to vector<1x128xf32>
    %5 = vector.broadcast %4 : vector<1x128xf32> to vector<256x128xf32>
    %6 = arith.addf %3, %5 : vector<256x128xf32>
    %cst_5 = arith.constant 0.000000e+00 : f32
    %7 = vector.broadcast %cst_5 : f32 to vector<256x128xf32>
    %8 = arith.maximumf %6, %7 : vector<256x128xf32>
    %9 = arith.truncf %8 : vector<256x128xf32> to vector<256x128xbf16>
    %c0_6 = arith.constant 0 : index
    %c0_7 = arith.constant 0 : index
    %10 = vector.load %arg3[%c0_6, %c0_7] : memref<128x128xbf16, #tpu.memory_space<vmem>>, vector<128x128xbf16>
    %cst_8 = arith.constant dense<0.000000e+00> : vector<256x128xf32>
    %11 = tpu.matmul %9, %10, %cst_8 {dimension_numbers = #tpu.dot_dimension_numbers<[1], [0], [0], [1], [0, 0, 1, 1], [], []>} : vector<256x128xbf16>, vector<128x128xbf16>, vector<256x128xf32> -> vector<256x128xf32>
    %12 = vector.extract_strided_slice %0 {offsets = [1, 0], sizes = [1, 128], strides = [1, 1]} : vector<3x128xf32> to vector<1x128xf32>
    %13 = vector.broadcast %12 : vector<1x128xf32> to vector<256x128xf32>
    %14 = arith.addf %11, %13 : vector<256x128xf32>
    %cst_9 = arith.constant 0.000000e+00 : f32
    %15 = vector.broadcast %cst_9 : f32 to vector<256x128xf32>
    %16 = arith.maximumf %14, %15 : vector<256x128xf32>
    %17 = arith.truncf %16 : vector<256x128xf32> to vector<256x128xbf16>
    %c0_10 = arith.constant 0 : index
    %c0_11 = arith.constant 0 : index
    %18 = vector.load %arg4[%c0_10, %c0_11] : memref<128x128xbf16, #tpu.memory_space<vmem>>, vector<128x128xbf16>
    %cst_12 = arith.constant dense<0.000000e+00> : vector<256x128xf32>
    %19 = tpu.matmul %17, %18, %cst_12 {dimension_numbers = #tpu.dot_dimension_numbers<[1], [0], [0], [1], [0, 0, 1, 1], [], []>} : vector<256x128xbf16>, vector<128x128xbf16>, vector<256x128xf32> -> vector<256x128xf32>
    %20 = vector.extract_strided_slice %0 {offsets = [2, 0], sizes = [1, 128], strides = [1, 1]} : vector<3x128xf32> to vector<1x128xf32>
    %21 = vector.broadcast %20 : vector<1x128xf32> to vector<256x128xf32>
    %22 = arith.addf %19, %21 : vector<256x128xf32>
    %23 = tpu.transpose %22, [1, 0] : vector<256x128xf32> -> vector<128x256xf32>
    %24 = vector.extract_strided_slice %23 {offsets = [0, 0], sizes = [8, 256], strides = [1, 1]} : vector<128x256xf32> to vector<8x256xf32>
    %c0_13 = arith.constant 0 : index
    %c0_14 = arith.constant 0 : index
    %25 = vector.load %arg6[%c0_13, %c0_14] : memref<8x256xf32, #tpu.memory_space<vmem>>, vector<8x256xf32>
    tpu.vector_store %arg6[%c0_13, %c0_14], %24 {strides = array<i32>} : memref<8x256xf32, #tpu.memory_space<vmem>>, vector<8x256xf32>,
    return
  }
  func.func @transform_0(%arg0: i32) -> (i32, i32) {
    %c0_i32 = arith.constant 0 : i32
    %c0_i32_0 = arith.constant 0 : i32
    return %arg0, %c0_i32 : i32, i32
  }
  func.func @transform_1(%arg0: i32) -> (i32, i32) {
    %c0_i32 = arith.constant 0 : i32
    %c0_i32_0 = arith.constant 0 : i32
    %c0_i32_1 = arith.constant 0 : i32
    return %c0_i32, %c0_i32_0 : i32, i32
  }
  func.func @transform_2(%arg0: i32) -> (i32, i32) {
    %c0_i32 = arith.constant 0 : i32
    %c0_i32_0 = arith.constant 0 : i32
    %c0_i32_1 = arith.constant 0 : i32
    return %c0_i32, %c0_i32_0 : i32, i32
  }
  func.func @transform_3(%arg0: i32) -> (i32, i32) {
    %c0_i32 = arith.constant 0 : i32
    %c0_i32_0 = arith.constant 0 : i32
    %c0_i32_1 = arith.constant 0 : i32
    return %c0_i32, %c0_i32_0 : i32, i32
  }
  func.func @transform_4(%arg0: i32) -> (i32, i32) {
    %c0_i32 = arith.constant 0 : i32
    %c0_i32_0 = arith.constant 0 : i32
    %c0_i32_1 = arith.constant 0 : i32
    return %c0_i32, %c0_i32_0 : i32, i32
  }
  func.func @transform_5(%arg0: i32) -> (i32, i32) {
    %c0_i32 = arith.constant 0 : i32
    %c0_i32_0 = arith.constant 0 : i32
    return %c0_i32, %arg0 : i32, i32
  }
}

module attributes {stable_mosaic.version = 11 : i64} {
  func.func @_mlp_kernel(%arg0: i32, %arg1: memref<256x32xbf16, #tpu.memory_space<vmem>>, %arg2: memref<32x128xbf16, #tpu.memory_space<vmem>>, %arg3: memref<128x128xbf16, #tpu.memory_space<vmem>>, %arg4: memref<128x128xbf16, #tpu.memory_space<vmem>>, %arg5: memref<3x128xf32, #tpu.memory_space<vmem>>, %arg6: memref<8x256xf32, #tpu.memory_space<vmem>>) attributes {dimension_semantics = [#tpu.dimension_semantics<parallel>], iteration_bounds = array<i64: 1>, scalar_prefetch = 0 : i64, scratch_operands = 0 : i64, tpu.core_type = #tpu.core_type<tc>, window_params = [{transform_indices = @transform_0, window_bounds = array<i64: 256, 32>}, {pipeline_mode = #tpu.pipeline_mode<synchronous>, transform_indices = @transform_1, window_bounds = array<i64: 32, 128>}, {pipeline_mode = #tpu.pipeline_mode<synchronous>, transform_indices = @transform_2, window_bounds = array<i64: 128, 128>}, {pipeline_mode = #tpu.pipeline_mode<synchronous>, transform_indices = @transform_3, window_bounds = array<i64: 128, 128>}, {pipeline_mode = #tpu.pipeline_mode<synchronous>, transform_indices = @transform_4, window_bounds = array<i64: 3, 128>}, {transform_indices = @transform_5, window_bounds = array<i64: 8, 256>}]} {
    %c0 = arith.constant 0 : index
    %c0_0 = arith.constant 0 : index
    %0 = vector.load %arg5[%c0, %c0_0] : memref<3x128xf32, #tpu.memory_space<vmem>>, vector<3x128xf32>
    %c0_1 = arith.constant 0 : index
    %c0_2 = arith.constant 0 : index
    %1 = vector.load %arg1[%c0_1, %c0_2] : memref<256x32xbf16, #tpu.memory_space<vmem>>, vector<256x32xbf16>
    %c0_3 = arith.constant 0 : index
    %c0_4 = arith.constant 0 : index
    %2 = vector.load %arg2[%c0_3, %c0_4] : memref<32x128xbf16, #tpu.memory_space<vmem>>, vector<32x128xbf16>
    %cst = arith.constant dense<0.000000e+00> : vector<256x128xf32>
    %3 = tpu.matmul %1, %2, %cst {dimension_numbers = #tpu.dot_dimension_numbers<[1], [0], [0], [1], [0, 0, 1, 1], [], []>} : vector<256x32xbf16>, vector<32x128xbf16>, vector<256x128xf32> -> vector<256x128xf32>
    %4 = vector.extract_strided_slice %0 {offsets = [0, 0], sizes = [1, 128], strides = [1, 1]} : vector<3x128xf32> to vector<1x128xf32>
    %5 = vector.broadcast %4 : vector<1x128xf32> to vector<256x128xf32>
    %6 = arith.addf %3, %5 : vector<256x128xf32>
    %cst_5 = arith.constant 0.000000e+00 : f32
    %7 = vector.broadcast %cst_5 : f32 to vector<256x128xf32>
    %8 = arith.maximumf %6, %7 : vector<256x128xf32>
    %9 = arith.truncf %8 : vector<256x128xf32> to vector<256x128xbf16>
    %c0_6 = arith.constant 0 : index
    %c0_7 = arith.constant 0 : index
    %10 = vector.load %arg3[%c0_6, %c0_7] : memref<128x128xbf16, #tpu.memory_space<vmem>>, vector<128x128xbf16>
    %cst_8 = arith.constant dense<0.000000e+00> : vector<256x128xf32>
    %11 = tpu.matmul %9, %10, %cst_8 {dimension_numbers = #tpu.dot_dimension_numbers<[1], [0], [0], [1], [0, 0, 1, 1], [], []>} : vector<256x128xbf16>, vector<128x128xbf16>, vector<256x128xf32> -> vector<256x128xf32>
    %12 = vector.extract_strided_slice %0 {offsets = [1, 0], sizes = [1, 128], strides = [1, 1]} : vector<3x128xf32> to vector<1x128xf32>
    %13 = vector.broadcast %12 : vector<1x128xf32> to vector<256x128xf32>
    %14 = arith.addf %11, %13 : vector<256x128xf32>
    %cst_9 = arith.constant 0.000000e+00 : f32
    %15 = vector.broadcast %cst_9 : f32 to vector<256x128xf32>
    %16 = arith.maximumf %14, %15 : vector<256x128xf32>
    %17 = arith.truncf %16 : vector<256x128xf32> to vector<256x128xbf16>
    %c0_10 = arith.constant 0 : index
    %c0_11 = arith.constant 0 : index
    %18 = vector.load %arg4[%c0_10, %c0_11] : memref<128x128xbf16, #tpu.memory_space<vmem>>, vector<128x128xbf16>
    %cst_12 = arith.constant dense<0.000000e+00> : vector<256x128xf32>
    %19 = tpu.matmul %17, %18, %cst_12 {dimension_numbers = #tpu.dot_dimension_numbers<[1], [0], [0], [1], [0, 0, 1, 1], [], []>} : vector<256x128xbf16>, vector<128x128xbf16>, vector<256x128xf32> -> vector<256x128xf32>
    %20 = vector.extract_strided_slice %0 {offsets = [2, 0], sizes = [1, 128], strides = [1, 1]} : vector<3x128xf32> to vector<1x128xf32>
    %21 = vector.broadcast %20 : vector<1x128xf32> to vector<256x128xf32>
    %22 = arith.addf %19, %21 : vector<256x128xf32>
    %23 = tpu.transpose %22, [1, 0] : vector<256x128xf32> -> vector<128x256xf32>
    %24 = vector.extract_strided_slice %23 {offsets = [0, 0], sizes = [8, 256], strides = [1, 1]} : vector<128x256xf32> to vector<8x256xf32>
    %c0_13 = arith.constant 0 : index
    %c0_14 = arith.constant 0 : index
    %25 = vector.load %arg6[%c0_13, %c0_14] : memref<8x256xf32, #tpu.memory_space<vmem>>, vector<8x256xf32>
    tpu.vector_store %arg6[%c0_13, %c0_14], %24 {strides = array<i32>} : memref<8x256xf32, #tpu.memory_space<vmem>>, vector<8x256xf32>,
    return
  }
  func.func @transform_0(%arg0: i32) -> (i32, i32) {
    %c0_i32 = arith.constant 0 : i32
    %c0_i32_0 = arith.constant 0 : i32
    return %arg0, %c0_i32 : i32, i32
  }
  func.func @transform_1(%arg0: i32) -> (i32, i32) {
    %c0_i32 = arith.constant 0 : i32
    %c0_i32_0 = arith.constant 0 : i32
    %c0_i32_1 = arith.constant 0 : i32
    return %c0_i32, %c0_i32_0 : i32, i32
  }
  func.func @transform_2(%arg0: i32) -> (i32, i32) {
    %c0_i32 = arith.constant 0 : i32
    %c0_i32_0 = arith.constant 0 : i32
    %c0_i32_1 = arith.constant 0 : i32
    return %c0_i32, %c0_i32_0 : i32, i32
  }
  func.func @transform_3(%arg0: i32) -> (i32, i32) {
    %c0_i32 = arith.constant 0 : i32
    %c0_i32_0 = arith.constant 0 : i32
    %c0_i32_1 = arith.constant 0 : i32
    return %c0_i32, %c0_i32_0 : i32, i32
  }
  func.func @transform_4(%arg0: i32) -> (i32, i32) {
    %c0_i32 = arith.constant 0 : i32
    %c0_i32_0 = arith.constant 0 : i32
    %c0_i32_1 = arith.constant 0 : i32
    return %c0_i32, %c0_i32_0 : i32, i32
  }
  func.func @transform_5(%arg0: i32) -> (i32, i32) {
    %c0_i32 = arith.constant 0 : i32
    %c0_i32_0 = arith.constant 0 : i32
    return %c0_i32, %arg0 : i32, i32
  }
}

</mosaic_0001>

<llo_original>
// kernel: tpu_custom_call.1
$region0: #{tpu_custom_call.1}
  #allocation0 [shape = 'u32[]', space=smem, size = 0x4, offset = 0x4, fixed_abs, tag = 'smem constant byte address 0x4 - core index']
  #allocation1 [shape = 'u32[144,128]{1,0:T(1,128)}', space=vmem, size = 0x12000, scoped, tag = 'internal scratch']
  %s0 = inlined_call_operand.vmem [shape: bf16[256,32], index: 0, kind: input, shape index: {}]
  %s1 = inlined_call_operand.vmem [shape: bf16[32,128], index: 1, kind: input, shape index: {}]
  %s2 = inlined_call_operand.vmem [shape: bf16[128,128], index: 2, kind: input, shape index: {}]
  %s3 = inlined_call_operand.vmem [shape: bf16[128,128], index: 3, kind: input, shape index: {}]
  %s4 = inlined_call_operand.vmem [shape: f32[3,128], index: 4, kind: input, shape index: {}]
  %s5 = inlined_call_operand.hbm [shape: f32[8,256], index: 5, kind: output, shape index: {}]
  %s6 = sld [smem:[#allocation0]]
  $region30: #{tpu_custom_call.1} parent=0
    _
  %s8 = ssub.s32 1, %s6
  %s9 = scalar_select 0, %s8, %s6
  $region1: #{tpu_custom_call.1} parent=0
    #allocation2 [shape = 'u8[8192]{0}', space=vmem, size = 0x2000, scoped, tag = 'output window, operand 0, single buffered']
    #allocation3 [shape = 's32[1]{0}', space=sflag, size = 0x4, scoped, tag = 'scoped memory for tpu_custom_call.1']
    %10 = vsyncpa [#allocation3], 0
    // Predicated region
    $region2: #{tpu_custom_call.1} parent=1 // pred_check
      _
    $region3: #{tpu_custom_call.1} parent=1 // pred_check_branch
      %12 = sbr.rel (0) target = $region5
    $region4: #{tpu_custom_call.1} parent=1 // pred_region
      _
    $region5: #{tpu_custom_call.1} parent=1 // pred_fallthru
      _
    // Predicated region
    $region6: #{tpu_custom_call.1} parent=1 // pred_check
      _
    $region7: #{tpu_custom_call.1} parent=1 // pred_check_branch
      %14 = sbr.rel (0) target = $region9
    $region8: #{tpu_custom_call.1} parent=1 // pred_region
      _
    $region9: #{tpu_custom_call.1} parent=1 // pred_fallthru
      _
    // Predicated region
    $region10: #{tpu_custom_call.1} parent=1 // pred_check
      _
    $region11: #{tpu_custom_call.1} parent=1 // pred_check_branch
      %16 = sbr.rel (0) target = $region13
    $region12: #{tpu_custom_call.1} parent=1 // pred_region
      _
    $region13: #{tpu_custom_call.1} parent=1 // pred_fallthru
      _
    // Predicated region
    $region14: #{tpu_custom_call.1} parent=1 // pred_check
      _
    $region15: #{tpu_custom_call.1} parent=1 // pred_check_branch
      %18 = sbr.rel (0) target = $region17
    $region16: #{tpu_custom_call.1} parent=1 // pred_region
      _
    $region17: #{tpu_custom_call.1} parent=1 // pred_fallthru
      _
    // Predicated region
    $region18: #{tpu_custom_call.1} parent=1 // pred_check
      _
    $region19: #{tpu_custom_call.1} parent=1 // pred_check_branch
      %20 = sbr.rel (0) target = $region21
    $region20: #{tpu_custom_call.1} parent=1 // pred_region
      _
    $region21: #{tpu_custom_call.1} parent=1 // pred_fallthru
      _
    %v22 = vld [vmem:[%s4] sm:$0x7]
    %v23 = vld [vmem:[%s0] sm:$0xf]
    %v24 = vld [vmem:[%s0 + $0x4] sm:$0xf]
    %v25 = vld [vmem:[%s0 + $0x8] sm:$0xf]
    %v26 = vld [vmem:[%s0 + $0xc] sm:$0xf]
    %v27 = vld [vmem:[%s0 + $0x10] sm:$0xf]
    %v28 = vld [vmem:[%s0 + $0x14] sm:$0xf]
    %v29 = vld [vmem:[%s0 + $0x18] sm:$0xf]
    %v30 = vld [vmem:[%s0 + $0x1c] sm:$0xf]
    %v31 = vld [vmem:[%s0 + $0x20] sm:$0xf]
    %v32 = vld [vmem:[%s0 + $0x24] sm:$0xf]
    %v33 = vld [vmem:[%s0 + $0x28] sm:$0xf]
    %v34 = vld [vmem:[%s0 + $0x2c] sm:$0xf]
    %v35 = vld [vmem:[%s0 + $0x30] sm:$0xf]
    %v36 = vld [vmem:[%s0 + $0x34] sm:$0xf]
    %v37 = vld [vmem:[%s0 + $0x38] sm:$0xf]
    %v38 = vld [vmem:[%s0 + $0x3c] sm:$0xf]
    %v39 = vld [vmem:[%s0 + $0x40] sm:$0xf]
    %v40 = vld [vmem:[%s0 + $0x44] sm:$0xf]
    %v41 = vld [vmem:[%s0 + $0x48] sm:$0xf]
    %v42 = vld [vmem:[%s0 + $0x4c] sm:$0xf]
    %v43 = vld [vmem:[%s0 + $0x50] sm:$0xf]
    %v44 = vld [vmem:[%s0 + $0x54] sm:$0xf]
    %v45 = vld [vmem:[%s0 + $0x58] sm:$0xf]
    %v46 = vld [vmem:[%s0 + $0x5c] sm:$0xf]
    %v47 = vld [vmem:[%s0 + $0x60] sm:$0xf]
    %v48 = vld [vmem:[%s0 + $0x64] sm:$0xf]
    %v49 = vld [vmem:[%s0 + $0x68] sm:$0xf]
    %v50 = vld [vmem:[%s0 + $0x6c] sm:$0xf]
    %v51 = vld [vmem:[%s0 + $0x70] sm:$0xf]
    %v52 = vld [vmem:[%s0 + $0x74] sm:$0xf]
    %v53 = vld [vmem:[%s0 + $0x78] sm:$0xf]
    %v54 = vld [vmem:[%s0 + $0x7c] sm:$0xf]
    %v55 = vld [vmem:[%s1] sm:$0xf]
    %v56 = vld [vmem:[%s1 + $0x4] sm:$0xf]
    %v57 = vld [vmem:[%s1 + $0x8] sm:$0xf]
    %v58 = vld [vmem:[%s1 + $0xc] sm:$0xf]
    %v59 = vlaneseq
    %v60 = vshrl.u32 %v59, 7
    %v61 = vsub.s32 0, %v60
    %v62 = vrot.slane %v22, %v61
    %v95 = vunpack.c.l.b16 %v23
    %v96 = vunpack.c.l.b16 %v24
    %v97 = vunpack.c.l.b16 %v25
    %v98 = vunpack.c.l.b16 %v26
    %v99 = vunpack.c.l.b16 %v27
    %v100 = vunpack.c.l.b16 %v28
    %v101 = vunpack.c.l.b16 %v29
    %v102 = vunpack.c.l.b16 %v30
    %v103 = vunpack.c.l.b16 %v31
    %v104 = vunpack.c.l.b16 %v32
    %v105 = vunpack.c.l.b16 %v33
    %v106 = vunpack.c.l.b16 %v34
    %v107 = vunpack.c.l.b16 %v35
    %v108 = vunpack.c.l.b16 %v36
    %v109 = vunpack.c.l.b16 %v37
    %v110 = vunpack.c.l.b16 %v38
    %v111 = vunpack.c.l.b16 %v39
    %v112 = vunpack.c.l.b16 %v40
    %v113 = vunpack.c.l.b16 %v41
    %v114 = vunpack.c.l.b16 %v42
    %v115 = vunpack.c.l.b16 %v43
    %v116 = vunpack.c.l.b16 %v44
    %v117 = vunpack.c.l.b16 %v45
    %v118 = vunpack.c.l.b16 %v46
    %v119 = vunpack.c.l.b16 %v47
    %v120 = vunpack.c.l.b16 %v48
    %v121 = vunpack.c.l.b16 %v49
    %v122 = vunpack.c.l.b16 %v50
    %v123 = vunpack.c.l.b16 %v51
    %v124 = vunpack.c.l.b16 %v52
    %v125 = vunpack.c.l.b16 %v53
    %v126 = vunpack.c.l.b16 %v54
    %v127 = vpack.c.b16 %v96, %v95
    %v128 = vpack.c.b16 %v98, %v97
    %v129 = vpack.c.b16 %v100, %v99
    %v130 = vpack.c.b16 %v102, %v101
    %v131 = vpack.c.b16 %v104, %v103
    %v132 = vpack.c.b16 %v106, %v105
    %v133 = vpack.c.b16 %v108, %v107
    %v134 = vpack.c.b16 %v110, %v109
    %v135 = vpack.c.b16 %v112, %v111
    %v136 = vpack.c.b16 %v114, %v113
    %v137 = vpack.c.b16 %v116, %v115
    %v138 = vpack.c.b16 %v118, %v117
    %v139 = vpack.c.b16 %v120, %v119
    %v140 = vpack.c.b16 %v122, %v121
    %v141 = vpack.c.b16 %v124, %v123
    %v142 = vpack.c.b16 %v126, %v125
    %v147 = vunpack.c.l.b16 %v55
    %v148 = vunpack.c.l.b16 %v56
    %v149 = vunpack.c.l.b16 %v57
    %v150 = vunpack.c.l.b16 %v58
    %v151 = vpack.c.b16 %v148, %v147
    %v152 = vpack.c.b16 %v150, %v149
    %vm155 = vcmask 261120
    %v157 = vsel %vm155, %v127, 0
    %v160 = vsel %vm155, %v128, 0
    %v163 = vsel %vm155, %v129, 0
    %v166 = vsel %vm155, %v130, 0
    %v169 = vsel %vm155, %v131, 0
    %v172 = vsel %vm155, %v132, 0
    %v175 = vsel %vm155, %v133, 0
    %v178 = vsel %vm155, %v134, 0
    %v181 = vsel %vm155, %v135, 0
    %v184 = vsel %vm155, %v136, 0
    %v187 = vsel %vm155, %v137, 0
    %v190 = vsel %vm155, %v138, 0
    %v193 = vsel %vm155, %v139, 0
    %v196 = vsel %vm155, %v140, 0
    %v199 = vsel %vm155, %v141, 0
    %v202 = vsel %vm155, %v142, 0
    %204 = vmatprep.subr.bf16.mxu0 0
    %205 = vmatpush1.bf16.msra.mxu0 0
    %206 = vmatprep.subr.bf16.mxu0 0
    %207 = vmatpush1.bf16.msra.mxu0 0
    %208 = vmatprep.subr.bf16.mxu0 0
    %209 = vmatpush1.bf16.msra.mxu0 0
    %210 = vmatprep.subr.bf16.mxu0 0
    %211 = vmatpush1.bf16.msra.mxu0 0
    %212 = vmatprep.subr.bf16.mxu0 0
    %213 = vmatpush1.bf16.msra.mxu0 0
    %214 = vmatprep.subr.bf16.mxu0 0
    %215 = vmatpush1.bf16.msra.mxu0 0
    %216 = vmatprep.subr.bf16.mxu0 0
    %217 = vmatpush1.bf16.msra.mxu0 %v152
    %218 = vmatprep.subr.bf16.mxu0 0
    %219 = vmatpush1.bf16.msra.mxu0 %v151
    %220 = vmatprep.subr.bf16.mxu0 0
    %221 = vmatpush2.bf16.msra.mxu0 0
    %222 = vmatprep.subr.bf16.mxu0 0
    %223 = vmatpush2.bf16.msra.mxu0 0
    %224 = vmatprep.subr.bf16.mxu0 0
    %225 = vmatpush2.bf16.msra.mxu0 0
    %226 = vmatprep.subr.bf16.mxu0 0
    %227 = vmatpush2.bf16.msra.mxu0 0
    %228 = vmatprep.subr.bf16.mxu0 0
    %229 = vmatpush2.bf16.msra.mxu0 0
    %230 = vmatprep.subr.bf16.mxu0 0
    %231 = vmatpush2.bf16.msra.mxu0 0
    %232 = vmatprep.subr.bf16.mxu0 0
    %233 = vmatpush2.bf16.msra.mxu0 0
    %234 = vmatprep.subr.bf16.mxu0 0
    %235 = vmatpush2.bf16.msra.mxu0 0
    %236 = vmatprep.mubr.bf16.mxu0 0
    %237 = vmatmul.mubr.bf16.gmra.mxu0 %v157
    %v238 = vpop.f32.mrf.mxu0
    %v239 = vadd.f32 %v62, %v238
    %v240 = vpop.f32.mrf.mxu0
    %v241 = vpop.f32.mrf.mxu0
    %v242 = vadd.f32 %v62, %v241
    %v243 = vpop.f32.mrf.mxu0
    %244 = vmatprep.mubr.bf16.mxu0 0
    %245 = vmatmul.mubr.bf16.gmra.mxu0 %v160
    %v246 = vpop.f32.mrf.mxu0
    %v247 = vadd.f32 %v62, %v246
    %v248 = vpop.f32.mrf.mxu0
    %v249 = vpop.f32.mrf.mxu0
    %v250 = vadd.f32 %v62, %v249
    %v251 = vpop.f32.mrf.mxu0
    %252 = vmatprep.mubr.bf16.mxu0 0
    %253 = vmatmul.mubr.bf16.gmra.mxu0 %v163
    %v254 = vpop.f32.mrf.mxu0
    %v255 = vadd.f32 %v62, %v254
    %v256 = vpop.f32.mrf.mxu0
    %v257 = vpop.f32.mrf.mxu0
    %v258 = vadd.f32 %v62, %v257
    %v259 = vpop.f32.mrf.mxu0
    %260 = vmatprep.mubr.bf16.mxu0 0
    %261 = vmatmul.mubr.bf16.gmra.mxu0 %v166
    %v262 = vpop.f32.mrf.mxu0
    %v263 = vadd.f32 %v62, %v262
    %v264 = vpop.f32.mrf.mxu0
    %v265 = vpop.f32.mrf.mxu0
    %v266 = vadd.f32 %v62, %v265
    %v267 = vpop.f32.mrf.mxu0
    %268 = vmatprep.mubr.bf16.mxu0 0
    %269 = vmatmul.mubr.bf16.gmra.mxu0 %v169
    %v270 = vpop.f32.mrf.mxu0
    %v271 = vadd.f32 %v62, %v270
    %v272 = vpop.f32.mrf.mxu0
    %v273 = vpop.f32.mrf.mxu0
    %v274 = vadd.f32 %v62, %v273
    %v275 = vpop.f32.mrf.mxu0
    %276 = vmatprep.mubr.bf16.mxu0 0
    %277 = vmatmul.mubr.bf16.gmra.mxu0 %v172
    %v278 = vpop.f32.mrf.mxu0
    %v279 = vadd.f32 %v62, %v278
    %v280 = vpop.f32.mrf.mxu0
    %v281 = vpop.f32.mrf.mxu0
    %v282 = vadd.f32 %v62, %v281
    %v283 = vpop.f32.mrf.mxu0
    %284 = vmatprep.mubr.bf16.mxu0 0
    %285 = vmatmul.mubr.bf16.gmra.mxu0 %v175
    %v286 = vpop.f32.mrf.mxu0
    %v287 = vadd.f32 %v62, %v286
    %v288 = vpop.f32.mrf.mxu0
    %v289 = vpop.f32.mrf.mxu0
    %v290 = vadd.f32 %v62, %v289
    %v291 = vpop.f32.mrf.mxu0
    %292 = vmatprep.mubr.bf16.mxu0 0
    %293 = vmatmul.mubr.bf16.gmra.mxu0 %v178
    %v294 = vpop.f32.mrf.mxu0
    %v295 = vadd.f32 %v62, %v294
    %v296 = vpop.f32.mrf.mxu0
    %v297 = vpop.f32.mrf.mxu0
    %v298 = vadd.f32 %v62, %v297
    %v299 = vpop.f32.mrf.mxu0
    %300 = vmatprep.mubr.bf16.mxu0 0
    %301 = vmatmul.mubr.bf16.gmra.mxu0 %v181
    %v302 = vpop.f32.mrf.mxu0
    %v303 = vadd.f32 %v62, %v302
    %v304 = vpop.f32.mrf.mxu0
    %v305 = vpop.f32.mrf.mxu0
    %v306 = vadd.f32 %v62, %v305
    %v307 = vpop.f32.mrf.mxu0
    %308 = vmatprep.mubr.bf16.mxu0 0
    %309 = vmatmul.mubr.bf16.gmra.mxu0 %v184
    %v310 = vpop.f32.mrf.mxu0
    %v311 = vadd.f32 %v62, %v310
    %v312 = vpop.f32.mrf.mxu0
    %v313 = vpop.f32.mrf.mxu0
    %v314 = vadd.f32 %v62, %v313
    %v315 = vpop.f32.mrf.mxu0
    %316 = vmatprep.mubr.bf16.mxu0 0
    %317 = vmatmul.mubr.bf16.gmra.mxu0 %v187
    %v318 = vpop.f32.mrf.mxu0
    %v319 = vadd.f32 %v62, %v318
    %v320 = vpop.f32.mrf.mxu0
    %v321 = vpop.f32.mrf.mxu0
    %v322 = vadd.f32 %v62, %v321
    %v323 = vpop.f32.mrf.mxu0
    %324 = vmatprep.mubr.bf16.mxu0 0
    %325 = vmatmul.mubr.bf16.gmra.mxu0 %v190
    %v326 = vpop.f32.mrf.mxu0
    %v327 = vadd.f32 %v62, %v326
    %v328 = vpop.f32.mrf.mxu0
    %v329 = vpop.f32.mrf.mxu0
    %v330 = vadd.f32 %v62, %v329
    %v331 = vpop.f32.mrf.mxu0
    %332 = vmatprep.mubr.bf16.mxu0 0
    %333 = vmatmul.mubr.bf16.gmra.mxu0 %v193
    %v334 = vpop.f32.mrf.mxu0
    %v335 = vadd.f32 %v62, %v334
    %v336 = vpop.f32.mrf.mxu0
    %v337 = vpop.f32.mrf.mxu0
    %v338 = vadd.f32 %v62, %v337
    %v339 = vpop.f32.mrf.mxu0
    %340 = vmatprep.mubr.bf16.mxu0 0
    %341 = vmatmul.mubr.bf16.gmra.mxu0 %v196
    %v342 = vpop.f32.mrf.mxu0
    %v343 = vadd.f32 %v62, %v342
    %v344 = vpop.f32.mrf.mxu0
    %v345 = vpop.f32.mrf.mxu0
    %v346 = vadd.f32 %v62, %v345
    %v347 = vpop.f32.mrf.mxu0
    %348 = vmatprep.mubr.bf16.mxu0 0
    %349 = vmatmul.mubr.bf16.gmra.mxu0 %v199
    %v350 = vpop.f32.mrf.mxu0
    %v351 = vadd.f32 %v62, %v350
    %v352 = vpop.f32.mrf.mxu0
    %v353 = vpop.f32.mrf.mxu0
    %v354 = vadd.f32 %v62, %v353
    %v355 = vpop.f32.mrf.mxu0
    %356 = vmatprep.mubr.bf16.mxu0 0
    %357 = vmatmul.mubr.bf16.gmra.mxu0 %v202
    %v358 = vpop.f32.mrf.mxu0
    %v359 = vadd.f32 %v62, %v358
    %v360 = vpop.f32.mrf.mxu0
    %v361 = vpop.f32.mrf.mxu0
    %v362 = vadd.f32 %v62, %v361
    %v363 = vpop.f32.mrf.mxu0
    %364 = vdwg.mxu0
    %v365 = vmax.f32 %v239, 0.0
    %v366 = vmax.f32 %v242, 0.0
    %v367 = vmax.f32 %v247, 0.0
    %v368 = vmax.f32 %v250, 0.0
    %v369 = vmax.f32 %v255, 0.0
    %v370 = vmax.f32 %v258, 0.0
    %v371 = vmax.f32 %v263, 0.0
    %v372 = vmax.f32 %v266, 0.0
    %v373 = vmax.f32 %v271, 0.0
    %v374 = vmax.f32 %v274, 0.0
    %v375 = vmax.f32 %v279, 0.0
    %v376 = vmax.f32 %v282, 0.0
    %v377 = vmax.f32 %v287, 0.0
    %v378 = vmax.f32 %v290, 0.0
    %v379 = vmax.f32 %v295, 0.0
    %v380 = vmax.f32 %v298, 0.0
    %v381 = vmax.f32 %v303, 0.0
    %v382 = vmax.f32 %v306, 0.0
    %v383 = vmax.f32 %v311, 0.0
    %v384 = vmax.f32 %v314, 0.0
    %v385 = vmax.f32 %v319, 0.0
    %v386 = vmax.f32 %v322, 0.0
    %v387 = vmax.f32 %v327, 0.0
    %v388 = vmax.f32 %v330, 0.0
    %v389 = vmax.f32 %v335, 0.0
    %v390 = vmax.f32 %v338, 0.0
    %v391 = vmax.f32 %v343, 0.0
    %v392 = vmax.f32 %v346, 0.0
    %v393 = vmax.f32 %v351, 0.0
    %v394 = vmax.f32 %v354, 0.0
    %v395 = vmax.f32 %v359, 0.0
    %v396 = vmax.f32 %v362, 0.0
    %v397 = vpack.c.bf16 %v366, %v365
    %v398 = vpack.c.bf16 %v368, %v367
    %v399 = vpack.c.bf16 %v370, %v369
    %v400 = vpack.c.bf16 %v372, %v371
    %v401 = vpack.c.bf16 %v374, %v373
    %v402 = vpack.c.bf16 %v376, %v375
    %v403 = vpack.c.bf16 %v378, %v377
    %v404 = vpack.c.bf16 %v380, %v379
    %v405 = vpack.c.bf16 %v382, %v381
    %v406 = vpack.c.bf16 %v384, %v383
    %v407 = vpack.c.bf16 %v386, %v385
    %v408 = vpack.c.bf16 %v388, %v387
    %v409 = vpack.c.bf16 %v390, %v389
    %v410 = vpack.c.bf16 %v392, %v391
    %v411 = vpack.c.bf16 %v394, %v393
    %v412 = vpack.c.bf16 %v396, %v395
    %v413 = vld [vmem:[%s2] sm:$0xf]
    %v414 = vld [vmem:[%s2 + $0x4] sm:$0xf]
    %v415 = vld [vmem:[%s2 + $0x8] sm:$0xf]
    %v416 = vld [vmem:[%s2 + $0xc] sm:$0xf]
    %v417 = vld [vmem:[%s2 + $0x10] sm:$0xf]
    %v418 = vld [vmem:[%s2 + $0x14] sm:$0xf]
    %v419 = vld [vmem:[%s2 + $0x18] sm:$0xf]
    %v420 = vld [vmem:[%s2 + $0x1c] sm:$0xf]
    %v421 = vld [vmem:[%s2 + $0x20] sm:$0xf]
    %v422 = vld [vmem:[%s2 + $0x24] sm:$0xf]
    %v423 = vld [vmem:[%s2 + $0x28] sm:$0xf]
    %v424 = vld [vmem:[%s2 + $0x2c] sm:$0xf]
    %v425 = vld [vmem:[%s2 + $0x30] sm:$0xf]
    %v426 = vld [vmem:[%s2 + $0x34] sm:$0xf]
    %v427 = vld [vmem:[%s2 + $0x38] sm:$0xf]
    %v428 = vld [vmem:[%s2 + $0x3c] sm:$0xf]
    %v429 = vlaneseq
    %v430 = vshrl.u32 %v429, 7
    %v431 = vsub.s32 1, %v430
    %v432 = vrot.slane %v22, %v431
    %v449 = vunpack.c.l.b16 %v413
    %v450 = vunpack.c.l.b16 %v414
    %v451 = vunpack.c.l.b16 %v415
    %v452 = vunpack.c.l.b16 %v416
    %v453 = vunpack.c.l.b16 %v417
    %v454 = vunpack.c.l.b16 %v418
    %v455 = vunpack.c.l.b16 %v419
    %v456 = vunpack.c.l.b16 %v420
    %v457 = vunpack.c.l.b16 %v421
    %v458 = vunpack.c.l.b16 %v422
    %v459 = vunpack.c.l.b16 %v423
    %v460 = vunpack.c.l.b16 %v424
    %v461 = vunpack.c.l.b16 %v425
    %v462 = vunpack.c.l.b16 %v426
    %v463 = vunpack.c.l.b16 %v427
    %v464 = vunpack.c.l.b16 %v428
    %v465 = vpack.c.b16 %v450, %v449
    %v466 = vpack.c.b16 %v452, %v451
    %v467 = vpack.c.b16 %v454, %v453
    %v468 = vpack.c.b16 %v456, %v455
    %v469 = vpack.c.b16 %v458, %v457
    %v470 = vpack.c.b16 %v460, %v459
    %v471 = vpack.c.b16 %v462, %v461
    %v472 = vpack.c.b16 %v464, %v463
    %481 = vmatprep.subr.bf16.mxu0 0
    %482 = vmatpush1.bf16.msra.mxu0 %v472
    %483 = vmatprep.subr.bf16.mxu0 0
    %484 = vmatpush1.bf16.msra.mxu0 %v471
    %485 = vmatprep.subr.bf16.mxu0 0
    %486 = vmatpush1.bf16.msra.mxu0 %v470
    %487 = vmatprep.subr.bf16.mxu0 0
    %488 = vmatpush1.bf16.msra.mxu0 %v469
    %489 = vmatprep.subr.bf16.mxu0 0
    %490 = vmatpush1.bf16.msra.mxu0 %v468
    %491 = vmatprep.subr.bf16.mxu0 0
    %492 = vmatpush1.bf16.msra.mxu0 %v467
    %493 = vmatprep.subr.bf16.mxu0 0
    %494 = vmatpush1.bf16.msra.mxu0 %v466
    %495 = vmatprep.subr.bf16.mxu0 0
    %496 = vmatpush1.bf16.msra.mxu0 %v465
    %497 = vmatprep.subr.bf16.mxu0 0
    %498 = vmatpush2.bf16.msra.mxu0 0
    %499 = vmatprep.subr.bf16.mxu0 0
    %500 = vmatpush2.bf16.msra.mxu0 0
    %501 = vmatprep.subr.bf16.mxu0 0
    %502 = vmatpush2.bf16.msra.mxu0 0
    %503 = vmatprep.subr.bf16.mxu0 0
    %504 = vmatpush2.bf16.msra.mxu0 0
    %505 = vmatprep.subr.bf16.mxu0 0
    %506 = vmatpush2.bf16.msra.mxu0 0
    %507 = vmatprep.subr.bf16.mxu0 0
    %508 = vmatpush2.bf16.msra.mxu0 0
    %509 = vmatprep.subr.bf16.mxu0 0
    %510 = vmatpush2.bf16.msra.mxu0 0
    %511 = vmatprep.subr.bf16.mxu0 0
    %512 = vmatpush2.bf16.msra.mxu0 0
    %513 = vmatprep.mubr.bf16.mxu0 0
    %514 = vmatmul.mubr.bf16.gmra.mxu0 %v397
    %v515 = vpop.f32.mrf.mxu0
    %v516 = vadd.f32 %v432, %v515
    %v517 = vpop.f32.mrf.mxu0
    %v518 = vpop.f32.mrf.mxu0
    %v519 = vadd.f32 %v432, %v518
    %v520 = vpop.f32.mrf.mxu0
    %521 = vmatprep.mubr.bf16.mxu0 0
    %522 = vmatmul.mubr.bf16.gmra.mxu0 %v398
    %v523 = vpop.f32.mrf.mxu0
    %v524 = vadd.f32 %v432, %v523
    %v525 = vpop.f32.mrf.mxu0
    %v526 = vpop.f32.mrf.mxu0
    %v527 = vadd.f32 %v432, %v526
    %v528 = vpop.f32.mrf.mxu0
    %529 = vmatprep.mubr.bf16.mxu0 0
    %530 = vmatmul.mubr.bf16.gmra.mxu0 %v399
    %v531 = vpop.f32.mrf.mxu0
    %v532 = vadd.f32 %v432, %v531
    %v533 = vpop.f32.mrf.mxu0
    %v534 = vpop.f32.mrf.mxu0
    %v535 = vadd.f32 %v432, %v534
    %v536 = vpop.f32.mrf.mxu0
    %537 = vmatprep.mubr.bf16.mxu0 0
    %538 = vmatmul.mubr.bf16.gmra.mxu0 %v400
    %v539 = vpop.f32.mrf.mxu0
    %v540 = vadd.f32 %v432, %v539
    %v541 = vpop.f32.mrf.mxu0
    %v542 = vpop.f32.mrf.mxu0
    %v543 = vadd.f32 %v432, %v542
    %v544 = vpop.f32.mrf.mxu0
    %545 = vmatprep.mubr.bf16.mxu0 0
    %546 = vmatmul.mubr.bf16.gmra.mxu0 %v401
    %v547 = vpop.f32.mrf.mxu0
    %v548 = vadd.f32 %v432, %v547
    %v549 = vpop.f32.mrf.mxu0
    %v550 = vpop.f32.mrf.mxu0
    %v551 = vadd.f32 %v432, %v550
    %v552 = vpop.f32.mrf.mxu0
    %553 = vmatprep.mubr.bf16.mxu0 0
    %554 = vmatmul.mubr.bf16.gmra.mxu0 %v402
    %v555 = vpop.f32.mrf.mxu0
    %v556 = vadd.f32 %v432, %v555
    %v557 = vpop.f32.mrf.mxu0
    %v558 = vpop.f32.mrf.mxu0
    %v559 = vadd.f32 %v432, %v558
    %v560 = vpop.f32.mrf.mxu0
    %561 = vmatprep.mubr.bf16.mxu0 0
    %562 = vmatmul.mubr.bf16.gmra.mxu0 %v403
    %v563 = vpop.f32.mrf.mxu0
    %v564 = vadd.f32 %v432, %v563
    %v565 = vpop.f32.mrf.mxu0
    %v566 = vpop.f32.mrf.mxu0
    %v567 = vadd.f32 %v432, %v566
    %v568 = vpop.f32.mrf.mxu0
    %569 = vmatprep.mubr.bf16.mxu0 0
    %570 = vmatmul.mubr.bf16.gmra.mxu0 %v404
    %v571 = vpop.f32.mrf.mxu0
    %v572 = vadd.f32 %v432, %v571
    %v573 = vpop.f32.mrf.mxu0
    %v574 = vpop.f32.mrf.mxu0
    %v575 = vadd.f32 %v432, %v574
    %v576 = vpop.f32.mrf.mxu0
    %577 = vmatprep.mubr.bf16.mxu0 0
    %578 = vmatmul.mubr.bf16.gmra.mxu0 %v405
    %v579 = vpop.f32.mrf.mxu0
    %v580 = vadd.f32 %v432, %v579
    %v581 = vpop.f32.mrf.mxu0
    %v582 = vpop.f32.mrf.mxu0
    %v583 = vadd.f32 %v432, %v582
    %v584 = vpop.f32.mrf.mxu0
    %585 = vmatprep.mubr.bf16.mxu0 0
    %586 = vmatmul.mubr.bf16.gmra.mxu0 %v406
    %v587 = vpop.f32.mrf.mxu0
    %v588 = vadd.f32 %v432, %v587
    %v589 = vpop.f32.mrf.mxu0
    %v590 = vpop.f32.mrf.mxu0
    %v591 = vadd.f32 %v432, %v590
    %v592 = vpop.f32.mrf.mxu0
    %593 = vmatprep.mubr.bf16.mxu0 0
    %594 = vmatmul.mubr.bf16.gmra.mxu0 %v407
    %v595 = vpop.f32.mrf.mxu0
    %v596 = vadd.f32 %v432, %v595
    %v597 = vpop.f32.mrf.mxu0
    %v598 = vpop.f32.mrf.mxu0
    %v599 = vadd.f32 %v432, %v598
    %v600 = vpop.f32.mrf.mxu0
    %601 = vmatprep.mubr.bf16.mxu0 0
    %602 = vmatmul.mubr.bf16.gmra.mxu0 %v408
    %v603 = vpop.f32.mrf.mxu0
    %v604 = vadd.f32 %v432, %v603
    %v605 = vpop.f32.mrf.mxu0
    %v606 = vpop.f32.mrf.mxu0
    %v607 = vadd.f32 %v432, %v606
    %v608 = vpop.f32.mrf.mxu0
    %609 = vmatprep.mubr.bf16.mxu0 0
    %610 = vmatmul.mubr.bf16.gmra.mxu0 %v409
    %v611 = vpop.f32.mrf.mxu0
    %v612 = vadd.f32 %v432, %v611
    %v613 = vpop.f32.mrf.mxu0
    %v614 = vpop.f32.mrf.mxu0
    %v615 = vadd.f32 %v432, %v614
    %v616 = vpop.f32.mrf.mxu0
    %617 = vmatprep.mubr.bf16.mxu0 0
    %618 = vmatmul.mubr.bf16.gmra.mxu0 %v410
    %v619 = vpop.f32.mrf.mxu0
    %v620 = vadd.f32 %v432, %v619
    %v621 = vpop.f32.mrf.mxu0
    %v622 = vpop.f32.mrf.mxu0
    %v623 = vadd.f32 %v432, %v622
    %v624 = vpop.f32.mrf.mxu0
    %625 = vmatprep.mubr.bf16.mxu0 0
    %626 = vmatmul.mubr.bf16.gmra.mxu0 %v411
    %v627 = vpop.f32.mrf.mxu0
    %v628 = vadd.f32 %v432, %v627
    %v629 = vpop.f32.mrf.mxu0
    %v630 = vpop.f32.mrf.mxu0
    %v631 = vadd.f32 %v432, %v630
    %v632 = vpop.f32.mrf.mxu0
    %633 = vmatprep.mubr.bf16.mxu0 0
    %634 = vmatmul.mubr.bf16.gmra.mxu0 %v412
    %v635 = vpop.f32.mrf.mxu0
    %v636 = vadd.f32 %v432, %v635
    %v637 = vpop.f32.mrf.mxu0
    %v638 = vpop.f32.mrf.mxu0
    %v639 = vadd.f32 %v432, %v638
    %v640 = vpop.f32.mrf.mxu0
    %641 = vdwg.mxu0
    %v642 = vmax.f32 %v516, 0.0
    %v643 = vmax.f32 %v519, 0.0
    %v644 = vmax.f32 %v524, 0.0
    %v645 = vmax.f32 %v527, 0.0
    %v646 = vmax.f32 %v532, 0.0
    %v647 = vmax.f32 %v535, 0.0
    %v648 = vmax.f32 %v540, 0.0
    %v649 = vmax.f32 %v543, 0.0
    %v650 = vmax.f32 %v548, 0.0
    %v651 = vmax.f32 %v551, 0.0
    %v652 = vmax.f32 %v556, 0.0
    %v653 = vmax.f32 %v559, 0.0
    %v654 = vmax.f32 %v564, 0.0
    %v655 = vmax.f32 %v567, 0.0
    %v656 = vmax.f32 %v572, 0.0
    %v657 = vmax.f32 %v575, 0.0
    %v658 = vmax.f32 %v580, 0.0
    %v659 = vmax.f32 %v583, 0.0
    %v660 = vmax.f32 %v588, 0.0
    %v661 = vmax.f32 %v591, 0.0
    %v662 = vmax.f32 %v596, 0.0
    %v663 = vmax.f32 %v599, 0.0
    %v664 = vmax.f32 %v604, 0.0
    %v665 = vmax.f32 %v607, 0.0
    %v666 = vmax.f32 %v612, 0.0
    %v667 = vmax.f32 %v615, 0.0
    %v668 = vmax.f32 %v620, 0.0
    %v669 = vmax.f32 %v623, 0.0
    %v670 = vmax.f32 %v628, 0.0
    %v671 = vmax.f32 %v631, 0.0
    %v672 = vmax.f32 %v636, 0.0
    %v673 = vmax.f32 %v639, 0.0
    %v674 = vpack.c.bf16 %v643, %v642
    %v675 = vpack.c.bf16 %v645, %v644
    %v676 = vpack.c.bf16 %v647, %v646
    %v677 = vpack.c.bf16 %v649, %v648
    %v678 = vpack.c.bf16 %v651, %v650
    %v679 = vpack.c.bf16 %v653, %v652
    %v680 = vpack.c.bf16 %v655, %v654
    %v681 = vpack.c.bf16 %v657, %v656
    %v682 = vpack.c.bf16 %v659, %v658
    %v683 = vpack.c.bf16 %v661, %v660
    %v684 = vpack.c.bf16 %v663, %v662
    %v685 = vpack.c.bf16 %v665, %v664
    %v686 = vpack.c.bf16 %v667, %v666
    %v687 = vpack.c.bf16 %v669, %v668
    %v688 = vpack.c.bf16 %v671, %v670
    %v689 = vpack.c.bf16 %v673, %v672
    %v690 = vld [vmem:[%s3] sm:$0xf]
    %v691 = vld [vmem:[%s3 + $0x4] sm:$0xf]
    %v692 = vld [vmem:[%s3 + $0x8] sm:$0xf]
    %v693 = vld [vmem:[%s3 + $0xc] sm:$0xf]
    %v694 = vld [vmem:[%s3 + $0x10] sm:$0xf]
    %v695 = vld [vmem:[%s3 + $0x14] sm:$0xf]
    %v696 = vld [vmem:[%s3 + $0x18] sm:$0xf]
    %v697 = vld [vmem:[%s3 + $0x1c] sm:$0xf]
    %v698 = vld [vmem:[%s3 + $0x20] sm:$0xf]
    %v699 = vld [vmem:[%s3 + $0x24] sm:$0xf]
    %v700 = vld [vmem:[%s3 + $0x28] sm:$0xf]
    %v701 = vld [vmem:[%s3 + $0x2c] sm:$0xf]
    %v702 = vld [vmem:[%s3 + $0x30] sm:$0xf]
    %v703 = vld [vmem:[%s3 + $0x34] sm:$0xf]
    %v704 = vld [vmem:[%s3 + $0x38] sm:$0xf]
    %v705 = vld [vmem:[%s3 + $0x3c] sm:$0xf]
    %v706 = vlaneseq
    %v707 = vshrl.u32 %v706, 7
    %v708 = vsub.s32 2, %v707
    %v709 = vrot.slane %v22, %v708
    %v726 = vunpack.c.l.b16 %v690
    %v727 = vunpack.c.l.b16 %v691
    %v728 = vunpack.c.l.b16 %v692
    %v729 = vunpack.c.l.b16 %v693
    %v730 = vunpack.c.l.b16 %v694
    %v731 = vunpack.c.l.b16 %v695
    %v732 = vunpack.c.l.b16 %v696
    %v733 = vunpack.c.l.b16 %v697
    %v734 = vunpack.c.l.b16 %v698
    %v735 = vunpack.c.l.b16 %v699
    %v736 = vunpack.c.l.b16 %v700
    %v737 = vunpack.c.l.b16 %v701
    %v738 = vunpack.c.l.b16 %v702
    %v739 = vunpack.c.l.b16 %v703
    %v740 = vunpack.c.l.b16 %v704
    %v741 = vunpack.c.l.b16 %v705
    %v742 = vpack.c.b16 %v727, %v726
    %v743 = vpack.c.b16 %v729, %v728
    %v744 = vpack.c.b16 %v731, %v730
    %v745 = vpack.c.b16 %v733, %v732
    %v746 = vpack.c.b16 %v735, %v734
    %v747 = vpack.c.b16 %v737, %v736
    %v748 = vpack.c.b16 %v739, %v738
    %v749 = vpack.c.b16 %v741, %v740
    %758 = vmatprep.subr.bf16.mxu0 0
    %759 = vmatpush1.bf16.msra.mxu0 %v749
    %760 = vmatprep.subr.bf16.mxu0 0
    %761 = vmatpush1.bf16.msra.mxu0 %v748
    %762 = vmatprep.subr.bf16.mxu0 0
    %763 = vmatpush1.bf16.msra.mxu0 %v747
    %764 = vmatprep.subr.bf16.mxu0 0
    %765 = vmatpush1.bf16.msra.mxu0 %v746
    %766 = vmatprep.subr.bf16.mxu0 0
    %767 = vmatpush1.bf16.msra.mxu0 %v745
    %768 = vmatprep.subr.bf16.mxu0 0
    %769 = vmatpush1.bf16.msra.mxu0 %v744
    %770 = vmatprep.subr.bf16.mxu0 0
    %771 = vmatpush1.bf16.msra.mxu0 %v743
    %772 = vmatprep.subr.bf16.mxu0 0
    %773 = vmatpush1.bf16.msra.mxu0 %v742
    %774 = vmatprep.subr.bf16.mxu0 0
    %775 = vmatpush2.bf16.msra.mxu0 0
    %776 = vmatprep.subr.bf16.mxu0 0
    %777 = vmatpush2.bf16.msra.mxu0 0
    %778 = vmatprep.subr.bf16.mxu0 0
    %779 = vmatpush2.bf16.msra.mxu0 0
    %780 = vmatprep.subr.bf16.mxu0 0
    %781 = vmatpush2.bf16.msra.mxu0 0
    %782 = vmatprep.subr.bf16.mxu0 0
    %783 = vmatpush2.bf16.msra.mxu0 0
    %784 = vmatprep.subr.bf16.mxu0 0
    %785 = vmatpush2.bf16.msra.mxu0 0
    %786 = vmatprep.subr.bf16.mxu0 0
    %787 = vmatpush2.bf16.msra.mxu0 0
    %788 = vmatprep.subr.bf16.mxu0 0
    %789 = vmatpush2.bf16.msra.mxu0 0
    %790 = vmatprep.mubr.bf16.mxu0 0
    %791 = vmatmul.mubr.bf16.gmra.mxu0 %v674
    %v792 = vpop.f32.mrf.mxu0
    %v793 = vadd.f32 %v709, %v792
    %v794 = vpop.f32.mrf.mxu0
    %v795 = vpop.f32.mrf.mxu0
    %v796 = vadd.f32 %v709, %v795
    %v797 = vpop.f32.mrf.mxu0
    %798 = vmatprep.mubr.bf16.mxu0 0
    %799 = vmatmul.mubr.bf16.gmra.mxu0 %v675
    %v800 = vpop.f32.mrf.mxu0
    %v801 = vadd.f32 %v709, %v800
    %v802 = vpop.f32.mrf.mxu0
    %v803 = vpop.f32.mrf.mxu0
    %v804 = vadd.f32 %v709, %v803
    %v805 = vpop.f32.mrf.mxu0
    %806 = vmatprep.mubr.bf16.mxu0 0
    %807 = vmatmul.mubr.bf16.gmra.mxu0 %v676
    %v808 = vpop.f32.mrf.mxu0
    %v809 = vadd.f32 %v709, %v808
    %v810 = vpop.f32.mrf.mxu0
    %v811 = vpop.f32.mrf.mxu0
    %v812 = vadd.f32 %v709, %v811
    %v813 = vpop.f32.mrf.mxu0
    %814 = vmatprep.mubr.bf16.mxu0 0
    %815 = vmatmul.mubr.bf16.gmra.mxu0 %v677
    %v816 = vpop.f32.mrf.mxu0
    %v817 = vadd.f32 %v709, %v816
    %v818 = vpop.f32.mrf.mxu0
    %v819 = vpop.f32.mrf.mxu0
    %v820 = vadd.f32 %v709, %v819
    %v821 = vpop.f32.mrf.mxu0
    %822 = vmatprep.mubr.bf16.mxu0 0
    %823 = vmatmul.mubr.bf16.gmra.mxu0 %v678
    %v824 = vpop.f32.mrf.mxu0
    %v825 = vadd.f32 %v709, %v824
    %v826 = vpop.f32.mrf.mxu0
    %v827 = vpop.f32.mrf.mxu0
    %v828 = vadd.f32 %v709, %v827
    %v829 = vpop.f32.mrf.mxu0
    %830 = vmatprep.mubr.bf16.mxu0 0
    %831 = vmatmul.mubr.bf16.gmra.mxu0 %v679
    %v832 = vpop.f32.mrf.mxu0
    %v833 = vadd.f32 %v709, %v832
    %v834 = vpop.f32.mrf.mxu0
    %v835 = vpop.f32.mrf.mxu0
    %v836 = vadd.f32 %v709, %v835
    %v837 = vpop.f32.mrf.mxu0
    %838 = vmatprep.mubr.bf16.mxu0 0
    %839 = vmatmul.mubr.bf16.gmra.mxu0 %v680
    %v840 = vpop.f32.mrf.mxu0
    %v841 = vadd.f32 %v709, %v840
    %v842 = vpop.f32.mrf.mxu0
    %v843 = vpop.f32.mrf.mxu0
    %v844 = vadd.f32 %v709, %v843
    %v845 = vpop.f32.mrf.mxu0
    %846 = vmatprep.mubr.bf16.mxu0 0
    %847 = vmatmul.mubr.bf16.gmra.mxu0 %v681
    %v848 = vpop.f32.mrf.mxu0
    %v849 = vadd.f32 %v709, %v848
    %v850 = vpop.f32.mrf.mxu0
    %v851 = vpop.f32.mrf.mxu0
    %v852 = vadd.f32 %v709, %v851
    %v853 = vpop.f32.mrf.mxu0
    %854 = vmatprep.mubr.bf16.mxu0 0
    %855 = vmatmul.mubr.bf16.gmra.mxu0 %v682
    %v856 = vpop.f32.mrf.mxu0
    %v857 = vadd.f32 %v709, %v856
    %v858 = vpop.f32.mrf.mxu0
    %v859 = vpop.f32.mrf.mxu0
    %v860 = vadd.f32 %v709, %v859
    %v861 = vpop.f32.mrf.mxu0
    %862 = vmatprep.mubr.bf16.mxu0 0
    %863 = vmatmul.mubr.bf16.gmra.mxu0 %v683
    %v864 = vpop.f32.mrf.mxu0
    %v865 = vadd.f32 %v709, %v864
    %v866 = vpop.f32.mrf.mxu0
    %v867 = vpop.f32.mrf.mxu0
    %v868 = vadd.f32 %v709, %v867
    %v869 = vpop.f32.mrf.mxu0
    %870 = vmatprep.mubr.bf16.mxu0 0
    %871 = vmatmul.mubr.bf16.gmra.mxu0 %v684
    %v872 = vpop.f32.mrf.mxu0
    %v873 = vadd.f32 %v709, %v872
    %v874 = vpop.f32.mrf.mxu0
    %v875 = vpop.f32.mrf.mxu0
    %v876 = vadd.f32 %v709, %v875
    %v877 = vpop.f32.mrf.mxu0
    %878 = vmatprep.mubr.bf16.mxu0 0
    %879 = vmatmul.mubr.bf16.gmra.mxu0 %v685
    %v880 = vpop.f32.mrf.mxu0
    %v881 = vadd.f32 %v709, %v880
    %v882 = vpop.f32.mrf.mxu0
    %v883 = vpop.f32.mrf.mxu0
    %v884 = vadd.f32 %v709, %v883
    %v885 = vpop.f32.mrf.mxu0
    %886 = vmatprep.mubr.bf16.mxu0 0
    %887 = vmatmul.mubr.bf16.gmra.mxu0 %v686
    %v888 = vpop.f32.mrf.mxu0
    %v889 = vadd.f32 %v709, %v888
    %v890 = vpop.f32.mrf.mxu0
    %v891 = vpop.f32.mrf.mxu0
    %v892 = vadd.f32 %v709, %v891
    %v893 = vpop.f32.mrf.mxu0
    %894 = vmatprep.mubr.bf16.mxu0 0
    %895 = vmatmul.mubr.bf16.gmra.mxu0 %v687
    %v896 = vpop.f32.mrf.mxu0
    %v897 = vadd.f32 %v709, %v896
    %v898 = vpop.f32.mrf.mxu0
    %v899 = vpop.f32.mrf.mxu0
    %v900 = vadd.f32 %v709, %v899
    %v901 = vpop.f32.mrf.mxu0
    %902 = vmatprep.mubr.bf16.mxu0 0
    %903 = vmatmul.mubr.bf16.gmra.mxu0 %v688
    %v904 = vpop.f32.mrf.mxu0
    %v905 = vadd.f32 %v709, %v904
    %v906 = vpop.f32.mrf.mxu0
    %v907 = vpop.f32.mrf.mxu0
    %v908 = vadd.f32 %v709, %v907
    %v909 = vpop.f32.mrf.mxu0
    %910 = vmatprep.mubr.bf16.mxu0 0
    %911 = vmatmul.mubr.bf16.gmra.mxu0 %v689
    %v912 = vpop.f32.mrf.mxu0
    %v913 = vadd.f32 %v709, %v912
    %v914 = vpop.f32.mrf.mxu0
    %v915 = vpop.f32.mrf.mxu0
    %v916 = vadd.f32 %v709, %v915
    %v917 = vpop.f32.mrf.mxu0
    %918 = vdwg.mxu0
    %919 = vxpose.xlu0.b32.start [1/16] %v793, 128
    %920 = vxpose.xlu0.b32.cont [2/16] %v796, 128
    %921 = vxpose.xlu0.b32.cont [3/16] %v801, 128
    %922 = vxpose.xlu0.b32.cont [4/16] %v804, 128
    %923 = vxpose.xlu0.b32.cont [5/16] %v809, 128
    %924 = vxpose.xlu0.b32.cont [6/16] %v812, 128
    %925 = vxpose.xlu0.b32.cont [7/16] %v817, 128
    %926 = vxpose.xlu0.b32.cont [8/16] %v820, 128
    %927 = vxpose.xlu0.b32.cont [9/16] %v825, 128
    %928 = vxpose.xlu0.b32.cont [10/16] %v828, 128
    %929 = vxpose.xlu0.b32.cont [11/16] %v833, 128
    %930 = vxpose.xlu0.b32.cont [12/16] %v836, 128
    %931 = vxpose.xlu0.b32.cont [13/16] %v841, 128
    %932 = vxpose.xlu0.b32.cont [14/16] %v844, 128
    %933 = vxpose.xlu0.b32.cont [15/16] %v849, 128
    %934 = vxpose.xlu0.b32.end [16/16] %v852, 128
    %v935 = vpop.trf.xlu0
    %v936 = vpop.trf.xlu0
    %v937 = vpop.trf.xlu0
    %v938 = vpop.trf.xlu0
    %v939 = vpop.trf.xlu0
    %v940 = vpop.trf.xlu0
    %v941 = vpop.trf.xlu0
    %v942 = vpop.trf.xlu0
    %v943 = vpop.trf.xlu0
    %v944 = vpop.trf.xlu0
    %v945 = vpop.trf.xlu0
    %v946 = vpop.trf.xlu0
    %v947 = vpop.trf.xlu0
    %v948 = vpop.trf.xlu0
    %v949 = vpop.trf.xlu0
    %v950 = vpop.trf.xlu0
    %951 = vxpose.xlu0.b32.start [1/16] %v857, 128
    %952 = vxpose.xlu0.b32.cont [2/16] %v860, 128
    %953 = vxpose.xlu0.b32.cont [3/16] %v865, 128
    %954 = vxpose.xlu0.b32.cont [4/16] %v868, 128
    %955 = vxpose.xlu0.b32.cont [5/16] %v873, 128
    %956 = vxpose.xlu0.b32.cont [6/16] %v876, 128
    %957 = vxpose.xlu0.b32.cont [7/16] %v881, 128
    %958 = vxpose.xlu0.b32.cont [8/16] %v884, 128
    %959 = vxpose.xlu0.b32.cont [9/16] %v889, 128
    %960 = vxpose.xlu0.b32.cont [10/16] %v892, 128
    %961 = vxpose.xlu0.b32.cont [11/16] %v897, 128
    %962 = vxpose.xlu0.b32.cont [12/16] %v900, 128
    %963 = vxpose.xlu0.b32.cont [13/16] %v905, 128
    %964 = vxpose.xlu0.b32.cont [14/16] %v908, 128
    %965 = vxpose.xlu0.b32.cont [15/16] %v913, 128
    %966 = vxpose.xlu0.b32.end [16/16] %v916, 128
    %v967 = vpop.trf.xlu0
    %v968 = vpop.trf.xlu0
    %v969 = vpop.trf.xlu0
    %v970 = vpop.trf.xlu0
    %v971 = vpop.trf.xlu0
    %v972 = vpop.trf.xlu0
    %v973 = vpop.trf.xlu0
    %v974 = vpop.trf.xlu0
    %v975 = vpop.trf.xlu0
    %v976 = vpop.trf.xlu0
    %v977 = vpop.trf.xlu0
    %v978 = vpop.trf.xlu0
    %v979 = vpop.trf.xlu0
    %v980 = vpop.trf.xlu0
    %v981 = vpop.trf.xlu0
    %v982 = vpop.trf.xlu0
    %983 = vst [vmem:[#allocation2] sm:$0xff] %v935
    %984 = vst [vmem:[#allocation2 + $0x8] sm:$0xff] %v967
    // Predicated region
    $region22: #{tpu_custom_call.1} parent=1 // pred_check
      _
    $region23: #{tpu_custom_call.1} parent=1 // pred_check_branch
      %986 = sbr.rel (0) target = $region25
    $region24: #{tpu_custom_call.1} parent=1 // pred_region
      %s988 = ssub.s32 256, 256
      %989 = vsyncadd [#allocation3], %s988
      %s991 = sshll.u32 [#allocation2], 4
      %s992 = int_to_ptr.vmem [resolvable:$true] %s991
      %994 = dma.vmem_to_hbm [thread:$0]  %s992, 256, %s5, [#allocation3]
    $region25: #{tpu_custom_call.1} parent=1 // pred_fallthru
      _
    // Predicated region
    $region26: #{tpu_custom_call.1} parent=1 // pred_check
      _
    $region27: #{tpu_custom_call.1} parent=1 // pred_check_branch
      %996 = sbr.rel (0) target = $region29
    $region28: #{tpu_custom_call.1} parent=1 // pred_region
      %997 = dma.done [#allocation3], 256
    $region29: #{tpu_custom_call.1} parent=1 // pred_fallthru
      _
    %998 = vsyncpa [#allocation3], 1

// kernel: tpu_custom_call.1
$region0: #{tpu_custom_call.1}
  #allocation0 [shape = 'u32[]', space=smem, size = 0x4, offset = 0x4, fixed_abs, tag = 'smem constant byte address 0x4 - core index']
  #allocation1 [shape = 'u32[144,128]{1,0:T(1,128)}', space=vmem, size = 0x12000, scoped, tag = 'internal scratch']
  %s0 = inlined_call_operand.vmem [shape: bf16[256,32], index: 0, kind: input, shape index: {}]
  %s1 = inlined_call_operand.vmem [shape: bf16[32,128], index: 1, kind: input, shape index: {}]
  %s2 = inlined_call_operand.vmem [shape: bf16[128,128], index: 2, kind: input, shape index: {}]
  %s3 = inlined_call_operand.vmem [shape: bf16[128,128], index: 3, kind: input, shape index: {}]
  %s4 = inlined_call_operand.vmem [shape: f32[3,128], index: 4, kind: input, shape index: {}]
  %s5 = inlined_call_operand.hbm [shape: f32[8,256], index: 5, kind: output, shape index: {}]
  %s6 = sld [smem:[#allocation0]]
  $region30: #{tpu_custom_call.1} parent=0
    _
  %s8 = ssub.s32 1, %s6
  %s9 = scalar_select 0, %s8, %s6
  $region1: #{tpu_custom_call.1} parent=0
    #allocation2 [shape = 'u8[8192]{0}', space=vmem, size = 0x2000, scoped, tag = 'output window, operand 0, single buffered']
    #allocation3 [shape = 's32[1]{0}', space=sflag, size = 0x4, scoped, tag = 'scoped memory for tpu_custom_call.1']
    %10 = vsyncpa [#allocation3], 0
    // Predicated region
    $region2: #{tpu_custom_call.1} parent=1 // pred_check
      _
    $region3: #{tpu_custom_call.1} parent=1 // pred_check_branch
      %12 = sbr.rel (0) target = $region5
    $region4: #{tpu_custom_call.1} parent=1 // pred_region
      _
    $region5: #{tpu_custom_call.1} parent=1 // pred_fallthru
      _
    // Predicated region
    $region6: #{tpu_custom_call.1} parent=1 // pred_check
      _
    $region7: #{tpu_custom_call.1} parent=1 // pred_check_branch
      %14 = sbr.rel (0) target = $region9
    $region8: #{tpu_custom_call.1} parent=1 // pred_region
      _
    $region9: #{tpu_custom_call.1} parent=1 // pred_fallthru
      _
    // Predicated region
    $region10: #{tpu_custom_call.1} parent=1 // pred_check
      _
    $region11: #{tpu_custom_call.1} parent=1 // pred_check_branch
      %16 = sbr.rel (0) target = $region13
    $region12: #{tpu_custom_call.1} parent=1 // pred_region
      _
    $region13: #{tpu_custom_call.1} parent=1 // pred_fallthru
      _
    // Predicated region
    $region14: #{tpu_custom_call.1} parent=1 // pred_check
      _
    $region15: #{tpu_custom_call.1} parent=1 // pred_check_branch
      %18 = sbr.rel (0) target = $region17
    $region16: #{tpu_custom_call.1} parent=1 // pred_region
      _
    $region17: #{tpu_custom_call.1} parent=1 // pred_fallthru
      _
    // Predicated region
    $region18: #{tpu_custom_call.1} parent=1 // pred_check
      _
    $region19: #{tpu_custom_call.1} parent=1 // pred_check_branch
      %20 = sbr.rel (0) target = $region21
    $region20: #{tpu_custom_call.1} parent=1 // pred_region
      _
    $region21: #{tpu_custom_call.1} parent=1 // pred_fallthru
      _
    %v22 = vld [vmem:[%s4] sm:$0x7]
    %v23 = vld [vmem:[%s0] sm:$0xf]
    %v24 = vld [vmem:[%s0 + $0x4] sm:$0xf]
    %v25 = vld [vmem:[%s0 + $0x8] sm:$0xf]
    %v26 = vld [vmem:[%s0 + $0xc] sm:$0xf]
    %v27 = vld [vmem:[%s0 + $0x10] sm:$0xf]
    %v28 = vld [vmem:[%s0 + $0x14] sm:$0xf]
    %v29 = vld [vmem:[%s0 + $0x18] sm:$0xf]
    %v30 = vld [vmem:[%s0 + $0x1c] sm:$0xf]
    %v31 = vld [vmem:[%s0 + $0x20] sm:$0xf]
    %v32 = vld [vmem:[%s0 + $0x24] sm:$0xf]
    %v33 = vld [vmem:[%s0 + $0x28] sm:$0xf]
    %v34 = vld [vmem:[%s0 + $0x2c] sm:$0xf]
    %v35 = vld [vmem:[%s0 + $0x30] sm:$0xf]
    %v36 = vld [vmem:[%s0 + $0x34] sm:$0xf]
    %v37 = vld [vmem:[%s0 + $0x38] sm:$0xf]
    %v38 = vld [vmem:[%s0 + $0x3c] sm:$0xf]
    %v39 = vld [vmem:[%s0 + $0x40] sm:$0xf]
    %v40 = vld [vmem:[%s0 + $0x44] sm:$0xf]
    %v41 = vld [vmem:[%s0 + $0x48] sm:$0xf]
    %v42 = vld [vmem:[%s0 + $0x4c] sm:$0xf]
    %v43 = vld [vmem:[%s0 + $0x50] sm:$0xf]
    %v44 = vld [vmem:[%s0 + $0x54] sm:$0xf]
    %v45 = vld [vmem:[%s0 + $0x58] sm:$0xf]
    %v46 = vld [vmem:[%s0 + $0x5c] sm:$0xf]
    %v47 = vld [vmem:[%s0 + $0x60] sm:$0xf]
    %v48 = vld [vmem:[%s0 + $0x64] sm:$0xf]
    %v49 = vld [vmem:[%s0 + $0x68] sm:$0xf]
    %v50 = vld [vmem:[%s0 + $0x6c] sm:$0xf]
    %v51 = vld [vmem:[%s0 + $0x70] sm:$0xf]
    %v52 = vld [vmem:[%s0 + $0x74] sm:$0xf]
    %v53 = vld [vmem:[%s0 + $0x78] sm:$0xf]
    %v54 = vld [vmem:[%s0 + $0x7c] sm:$0xf]
    %v55 = vld [vmem:[%s1] sm:$0xf]
    %v56 = vld [vmem:[%s1 + $0x4] sm:$0xf]
    %v57 = vld [vmem:[%s1 + $0x8] sm:$0xf]
    %v58 = vld [vmem:[%s1 + $0xc] sm:$0xf]
    %v59 = vlaneseq
    %v60 = vshrl.u32 %v59, 7
    %v61 = vsub.s32 0, %v60
    %v62 = vrot.slane %v22, %v61
    %v95 = vunpack.c.l.b16 %v23
    %v96 = vunpack.c.l.b16 %v24
    %v97 = vunpack.c.l.b16 %v25
    %v98 = vunpack.c.l.b16 %v26
    %v99 = vunpack.c.l.b16 %v27
    %v100 = vunpack.c.l.b16 %v28
    %v101 = vunpack.c.l.b16 %v29
    %v102 = vunpack.c.l.b16 %v30
    %v103 = vunpack.c.l.b16 %v31
    %v104 = vunpack.c.l.b16 %v32
    %v105 = vunpack.c.l.b16 %v33
    %v106 = vunpack.c.l.b16 %v34
    %v107 = vunpack.c.l.b16 %v35
    %v108 = vunpack.c.l.b16 %v36
    %v109 = vunpack.c.l.b16 %v37
    %v110 = vunpack.c.l.b16 %v38
    %v111 = vunpack.c.l.b16 %v39
    %v112 = vunpack.c.l.b16 %v40
    %v113 = vunpack.c.l.b16 %v41
    %v114 = vunpack.c.l.b16 %v42
    %v115 = vunpack.c.l.b16 %v43
    %v116 = vunpack.c.l.b16 %v44
    %v117 = vunpack.c.l.b16 %v45
    %v118 = vunpack.c.l.b16 %v46
    %v119 = vunpack.c.l.b16 %v47
    %v120 = vunpack.c.l.b16 %v48
    %v121 = vunpack.c.l.b16 %v49
    %v122 = vunpack.c.l.b16 %v50
    %v123 = vunpack.c.l.b16 %v51
    %v124 = vunpack.c.l.b16 %v52
    %v125 = vunpack.c.l.b16 %v53
    %v126 = vunpack.c.l.b16 %v54
    %v127 = vpack.c.b16 %v96, %v95
    %v128 = vpack.c.b16 %v98, %v97
    %v129 = vpack.c.b16 %v100, %v99
    %v130 = vpack.c.b16 %v102, %v101
    %v131 = vpack.c.b16 %v104, %v103
    %v132 = vpack.c.b16 %v106, %v105
    %v133 = vpack.c.b16 %v108, %v107
    %v134 = vpack.c.b16 %v110, %v109
    %v135 = vpack.c.b16 %v112, %v111
    %v136 = vpack.c.b16 %v114, %v113
    %v137 = vpack.c.b16 %v116, %v115
    %v138 = vpack.c.b16 %v118, %v117
    %v139 = vpack.c.b16 %v120, %v119
    %v140 = vpack.c.b16 %v122, %v121
    %v141 = vpack.c.b16 %v124, %v123
    %v142 = vpack.c.b16 %v126, %v125
    %v147 = vunpack.c.l.b16 %v55
    %v148 = vunpack.c.l.b16 %v56
    %v149 = vunpack.c.l.b16 %v57
    %v150 = vunpack.c.l.b16 %v58
    %v151 = vpack.c.b16 %v148, %v147
    %v152 = vpack.c.b16 %v150, %v149
    %vm155 = vcmask 261120
    %v157 = vsel %vm155, %v127, 0
    %v160 = vsel %vm155, %v128, 0
    %v163 = vsel %vm155, %v129, 0
    %v166 = vsel %vm155, %v130, 0
    %v169 = vsel %vm155, %v131, 0
    %v172 = vsel %vm155, %v132, 0
    %v175 = vsel %vm155, %v133, 0
    %v178 = vsel %vm155, %v134, 0
    %v181 = vsel %vm155, %v135, 0
    %v184 = vsel %vm155, %v136, 0
    %v187 = vsel %vm155, %v137, 0
    %v190 = vsel %vm155, %v138, 0
    %v193 = vsel %vm155, %v139, 0
    %v196 = vsel %vm155, %v140, 0
    %v199 = vsel %vm155, %v141, 0
    %v202 = vsel %vm155, %v142, 0
    %204 = vmatprep.subr.bf16.mxu0 0
    %205 = vmatpush1.bf16.msra.mxu0 0
    %206 = vmatprep.subr.bf16.mxu0 0
    %207 = vmatpush1.bf16.msra.mxu0 0
    %208 = vmatprep.subr.bf16.mxu0 0
    %209 = vmatpush1.bf16.msra.mxu0 0
    %210 = vmatprep.subr.bf16.mxu0 0
    %211 = vmatpush1.bf16.msra.mxu0 0
    %212 = vmatprep.subr.bf16.mxu0 0
    %213 = vmatpush1.bf16.msra.mxu0 0
    %214 = vmatprep.subr.bf16.mxu0 0
    %215 = vmatpush1.bf16.msra.mxu0 0
    %216 = vmatprep.subr.bf16.mxu0 0
    %217 = vmatpush1.bf16.msra.mxu0 %v152
    %218 = vmatprep.subr.bf16.mxu0 0
    %219 = vmatpush1.bf16.msra.mxu0 %v151
    %220 = vmatprep.subr.bf16.mxu0 0
    %221 = vmatpush2.bf16.msra.mxu0 0
    %222 = vmatprep.subr.bf16.mxu0 0
    %223 = vmatpush2.bf16.msra.mxu0 0
    %224 = vmatprep.subr.bf16.mxu0 0
    %225 = vmatpush2.bf16.msra.mxu0 0
    %226 = vmatprep.subr.bf16.mxu0 0
    %227 = vmatpush2.bf16.msra.mxu0 0
    %228 = vmatprep.subr.bf16.mxu0 0
    %229 = vmatpush2.bf16.msra.mxu0 0
    %230 = vmatprep.subr.bf16.mxu0 0
    %231 = vmatpush2.bf16.msra.mxu0 0
    %232 = vmatprep.subr.bf16.mxu0 0
    %233 = vmatpush2.bf16.msra.mxu0 0
    %234 = vmatprep.subr.bf16.mxu0 0
    %235 = vmatpush2.bf16.msra.mxu0 0
    %236 = vmatprep.mubr.bf16.mxu0 0
    %237 = vmatmul.mubr.bf16.gmra.mxu0 %v157
    %v238 = vpop.f32.mrf.mxu0
    %v239 = vadd.f32 %v62, %v238
    %v240 = vpop.f32.mrf.mxu0
    %v241 = vpop.f32.mrf.mxu0
    %v242 = vadd.f32 %v62, %v241
    %v243 = vpop.f32.mrf.mxu0
    %244 = vmatprep.mubr.bf16.mxu0 0
    %245 = vmatmul.mubr.bf16.gmra.mxu0 %v160
    %v246 = vpop.f32.mrf.mxu0
    %v247 = vadd.f32 %v62, %v246
    %v248 = vpop.f32.mrf.mxu0
    %v249 = vpop.f32.mrf.mxu0
    %v250 = vadd.f32 %v62, %v249
    %v251 = vpop.f32.mrf.mxu0
    %252 = vmatprep.mubr.bf16.mxu0 0
    %253 = vmatmul.mubr.bf16.gmra.mxu0 %v163
    %v254 = vpop.f32.mrf.mxu0
    %v255 = vadd.f32 %v62, %v254
    %v256 = vpop.f32.mrf.mxu0
    %v257 = vpop.f32.mrf.mxu0
    %v258 = vadd.f32 %v62, %v257
    %v259 = vpop.f32.mrf.mxu0
    %260 = vmatprep.mubr.bf16.mxu0 0
    %261 = vmatmul.mubr.bf16.gmra.mxu0 %v166
    %v262 = vpop.f32.mrf.mxu0
    %v263 = vadd.f32 %v62, %v262
    %v264 = vpop.f32.mrf.mxu0
    %v265 = vpop.f32.mrf.mxu0
    %v266 = vadd.f32 %v62, %v265
    %v267 = vpop.f32.mrf.mxu0
    %268 = vmatprep.mubr.bf16.mxu0 0
    %269 = vmatmul.mubr.bf16.gmra.mxu0 %v169
    %v270 = vpop.f32.mrf.mxu0
    %v271 = vadd.f32 %v62, %v270
    %v272 = vpop.f32.mrf.mxu0
    %v273 = vpop.f32.mrf.mxu0
    %v274 = vadd.f32 %v62, %v273
    %v275 = vpop.f32.mrf.mxu0
    %276 = vmatprep.mubr.bf16.mxu0 0
    %277 = vmatmul.mubr.bf16.gmra.mxu0 %v172
    %v278 = vpop.f32.mrf.mxu0
    %v279 = vadd.f32 %v62, %v278
    %v280 = vpop.f32.mrf.mxu0
    %v281 = vpop.f32.mrf.mxu0
    %v282 = vadd.f32 %v62, %v281
    %v283 = vpop.f32.mrf.mxu0
    %284 = vmatprep.mubr.bf16.mxu0 0
    %285 = vmatmul.mubr.bf16.gmra.mxu0 %v175
    %v286 = vpop.f32.mrf.mxu0
    %v287 = vadd.f32 %v62, %v286
    %v288 = vpop.f32.mrf.mxu0
    %v289 = vpop.f32.mrf.mxu0
    %v290 = vadd.f32 %v62, %v289
    %v291 = vpop.f32.mrf.mxu0
    %292 = vmatprep.mubr.bf16.mxu0 0
    %293 = vmatmul.mubr.bf16.gmra.mxu0 %v178
    %v294 = vpop.f32.mrf.mxu0
    %v295 = vadd.f32 %v62, %v294
    %v296 = vpop.f32.mrf.mxu0
    %v297 = vpop.f32.mrf.mxu0
    %v298 = vadd.f32 %v62, %v297
    %v299 = vpop.f32.mrf.mxu0
    %300 = vmatprep.mubr.bf16.mxu0 0
    %301 = vmatmul.mubr.bf16.gmra.mxu0 %v181
    %v302 = vpop.f32.mrf.mxu0
    %v303 = vadd.f32 %v62, %v302
    %v304 = vpop.f32.mrf.mxu0
    %v305 = vpop.f32.mrf.mxu0
    %v306 = vadd.f32 %v62, %v305
    %v307 = vpop.f32.mrf.mxu0
    %308 = vmatprep.mubr.bf16.mxu0 0
    %309 = vmatmul.mubr.bf16.gmra.mxu0 %v184
    %v310 = vpop.f32.mrf.mxu0
    %v311 = vadd.f32 %v62, %v310
    %v312 = vpop.f32.mrf.mxu0
    %v313 = vpop.f32.mrf.mxu0
    %v314 = vadd.f32 %v62, %v313
    %v315 = vpop.f32.mrf.mxu0
    %316 = vmatprep.mubr.bf16.mxu0 0
    %317 = vmatmul.mubr.bf16.gmra.mxu0 %v187
    %v318 = vpop.f32.mrf.mxu0
    %v319 = vadd.f32 %v62, %v318
    %v320 = vpop.f32.mrf.mxu0
    %v321 = vpop.f32.mrf.mxu0
    %v322 = vadd.f32 %v62, %v321
    %v323 = vpop.f32.mrf.mxu0
    %324 = vmatprep.mubr.bf16.mxu0 0
    %325 = vmatmul.mubr.bf16.gmra.mxu0 %v190
    %v326 = vpop.f32.mrf.mxu0
    %v327 = vadd.f32 %v62, %v326
    %v328 = vpop.f32.mrf.mxu0
    %v329 = vpop.f32.mrf.mxu0
    %v330 = vadd.f32 %v62, %v329
    %v331 = vpop.f32.mrf.mxu0
    %332 = vmatprep.mubr.bf16.mxu0 0
    %333 = vmatmul.mubr.bf16.gmra.mxu0 %v193
    %v334 = vpop.f32.mrf.mxu0
    %v335 = vadd.f32 %v62, %v334
    %v336 = vpop.f32.mrf.mxu0
    %v337 = vpop.f32.mrf.mxu0
    %v338 = vadd.f32 %v62, %v337
    %v339 = vpop.f32.mrf.mxu0
    %340 = vmatprep.mubr.bf16.mxu0 0
    %341 = vmatmul.mubr.bf16.gmra.mxu0 %v196
    %v342 = vpop.f32.mrf.mxu0
    %v343 = vadd.f32 %v62, %v342
    %v344 = vpop.f32.mrf.mxu0
    %v345 = vpop.f32.mrf.mxu0
    %v346 = vadd.f32 %v62, %v345
    %v347 = vpop.f32.mrf.mxu0
    %348 = vmatprep.mubr.bf16.mxu0 0
    %349 = vmatmul.mubr.bf16.gmra.mxu0 %v199
    %v350 = vpop.f32.mrf.mxu0
    %v351 = vadd.f32 %v62, %v350
    %v352 = vpop.f32.mrf.mxu0
    %v353 = vpop.f32.mrf.mxu0
    %v354 = vadd.f32 %v62, %v353
    %v355 = vpop.f32.mrf.mxu0
    %356 = vmatprep.mubr.bf16.mxu0 0
    %357 = vmatmul.mubr.bf16.gmra.mxu0 %v202
    %v358 = vpop.f32.mrf.mxu0
    %v359 = vadd.f32 %v62, %v358
    %v360 = vpop.f32.mrf.mxu0
    %v361 = vpop.f32.mrf.mxu0
    %v362 = vadd.f32 %v62, %v361
    %v363 = vpop.f32.mrf.mxu0
    %364 = vdwg.mxu0
    %v365 = vmax.f32 %v239, 0.0
    %v366 = vmax.f32 %v242, 0.0
    %v367 = vmax.f32 %v247, 0.0
    %v368 = vmax.f32 %v250, 0.0
    %v369 = vmax.f32 %v255, 0.0
    %v370 = vmax.f32 %v258, 0.0
    %v371 = vmax.f32 %v263, 0.0
    %v372 = vmax.f32 %v266, 0.0
    %v373 = vmax.f32 %v271, 0.0
    %v374 = vmax.f32 %v274, 0.0
    %v375 = vmax.f32 %v279, 0.0
    %v376 = vmax.f32 %v282, 0.0
    %v377 = vmax.f32 %v287, 0.0
    %v378 = vmax.f32 %v290, 0.0
    %v379 = vmax.f32 %v295, 0.0
    %v380 = vmax.f32 %v298, 0.0
    %v381 = vmax.f32 %v303, 0.0
    %v382 = vmax.f32 %v306, 0.0
    %v383 = vmax.f32 %v311, 0.0
    %v384 = vmax.f32 %v314, 0.0
    %v385 = vmax.f32 %v319, 0.0
    %v386 = vmax.f32 %v322, 0.0
    %v387 = vmax.f32 %v327, 0.0
    %v388 = vmax.f32 %v330, 0.0
    %v389 = vmax.f32 %v335, 0.0
    %v390 = vmax.f32 %v338, 0.0
    %v391 = vmax.f32 %v343, 0.0
    %v392 = vmax.f32 %v346, 0.0
    %v393 = vmax.f32 %v351, 0.0
    %v394 = vmax.f32 %v354, 0.0
    %v395 = vmax.f32 %v359, 0.0
    %v396 = vmax.f32 %v362, 0.0
    %v397 = vpack.c.bf16 %v366, %v365
    %v398 = vpack.c.bf16 %v368, %v367
    %v399 = vpack.c.bf16 %v370, %v369
    %v400 = vpack.c.bf16 %v372, %v371
    %v401 = vpack.c.bf16 %v374, %v373
    %v402 = vpack.c.bf16 %v376, %v375
    %v403 = vpack.c.bf16 %v378, %v377
    %v404 = vpack.c.bf16 %v380, %v379
    %v405 = vpack.c.bf16 %v382, %v381
    %v406 = vpack.c.bf16 %v384, %v383
    %v407 = vpack.c.bf16 %v386, %v385
    %v408 = vpack.c.bf16 %v388, %v387
    %v409 = vpack.c.bf16 %v390, %v389
    %v410 = vpack.c.bf16 %v392, %v391
    %v411 = vpack.c.bf16 %v394, %v393
    %v412 = vpack.c.bf16 %v396, %v395
    %v413 = vld [vmem:[%s2] sm:$0xf]
    %v414 = vld [vmem:[%s2 + $0x4] sm:$0xf]
    %v415 = vld [vmem:[%s2 + $0x8] sm:$0xf]
    %v416 = vld [vmem:[%s2 + $0xc] sm:$0xf]
    %v417 = vld [vmem:[%s2 + $0x10] sm:$0xf]
    %v418 = vld [vmem:[%s2 + $0x14] sm:$0xf]
    %v419 = vld [vmem:[%s2 + $0x18] sm:$0xf]
    %v420 = vld [vmem:[%s2 + $0x1c] sm:$0xf]
    %v421 = vld [vmem:[%s2 + $0x20] sm:$0xf]
    %v422 = vld [vmem:[%s2 + $0x24] sm:$0xf]
    %v423 = vld [vmem:[%s2 + $0x28] sm:$0xf]
    %v424 = vld [vmem:[%s2 + $0x2c] sm:$0xf]
    %v425 = vld [vmem:[%s2 + $0x30] sm:$0xf]
    %v426 = vld [vmem:[%s2 + $0x34] sm:$0xf]
    %v427 = vld [vmem:[%s2 + $0x38] sm:$0xf]
    %v428 = vld [vmem:[%s2 + $0x3c] sm:$0xf]
    %v429 = vlaneseq
    %v430 = vshrl.u32 %v429, 7
    %v431 = vsub.s32 1, %v430
    %v432 = vrot.slane %v22, %v431
    %v449 = vunpack.c.l.b16 %v413
    %v450 = vunpack.c.l.b16 %v414
    %v451 = vunpack.c.l.b16 %v415
    %v452 = vunpack.c.l.b16 %v416
    %v453 = vunpack.c.l.b16 %v417
    %v454 = vunpack.c.l.b16 %v418
    %v455 = vunpack.c.l.b16 %v419
    %v456 = vunpack.c.l.b16 %v420
    %v457 = vunpack.c.l.b16 %v421
    %v458 = vunpack.c.l.b16 %v422
    %v459 = vunpack.c.l.b16 %v423
    %v460 = vunpack.c.l.b16 %v424
    %v461 = vunpack.c.l.b16 %v425
    %v462 = vunpack.c.l.b16 %v426
    %v463 = vunpack.c.l.b16 %v427
    %v464 = vunpack.c.l.b16 %v428
    %v465 = vpack.c.b16 %v450, %v449
    %v466 = vpack.c.b16 %v452, %v451
    %v467 = vpack.c.b16 %v454, %v453
    %v468 = vpack.c.b16 %v456, %v455
    %v469 = vpack.c.b16 %v458, %v457
    %v470 = vpack.c.b16 %v460, %v459
    %v471 = vpack.c.b16 %v462, %v461
    %v472 = vpack.c.b16 %v464, %v463
    %481 = vmatprep.subr.bf16.mxu0 0
    %482 = vmatpush1.bf16.msra.mxu0 %v472
    %483 = vmatprep.subr.bf16.mxu0 0
    %484 = vmatpush1.bf16.msra.mxu0 %v471
    %485 = vmatprep.subr.bf16.mxu0 0
    %486 = vmatpush1.bf16.msra.mxu0 %v470
    %487 = vmatprep.subr.bf16.mxu0 0
    %488 = vmatpush1.bf16.msra.mxu0 %v469
    %489 = vmatprep.subr.bf16.mxu0 0
    %490 = vmatpush1.bf16.msra.mxu0 %v468
    %491 = vmatprep.subr.bf16.mxu0 0
    %492 = vmatpush1.bf16.msra.mxu0 %v467
    %493 = vmatprep.subr.bf16.mxu0 0
    %494 = vmatpush1.bf16.msra.mxu0 %v466
    %495 = vmatprep.subr.bf16.mxu0 0
    %496 = vmatpush1.bf16.msra.mxu0 %v465
    %497 = vmatprep.subr.bf16.mxu0 0
    %498 = vmatpush2.bf16.msra.mxu0 0
    %499 = vmatprep.subr.bf16.mxu0 0
    %500 = vmatpush2.bf16.msra.mxu0 0
    %501 = vmatprep.subr.bf16.mxu0 0
    %502 = vmatpush2.bf16.msra.mxu0 0
    %503 = vmatprep.subr.bf16.mxu0 0
    %504 = vmatpush2.bf16.msra.mxu0 0
    %505 = vmatprep.subr.bf16.mxu0 0
    %506 = vmatpush2.bf16.msra.mxu0 0
    %507 = vmatprep.subr.bf16.mxu0 0
    %508 = vmatpush2.bf16.msra.mxu0 0
    %509 = vmatprep.subr.bf16.mxu0 0
    %510 = vmatpush2.bf16.msra.mxu0 0
    %511 = vmatprep.subr.bf16.mxu0 0
    %512 = vmatpush2.bf16.msra.mxu0 0
    %513 = vmatprep.mubr.bf16.mxu0 0
    %514 = vmatmul.mubr.bf16.gmra.mxu0 %v397
    %v515 = vpop.f32.mrf.mxu0
    %v516 = vadd.f32 %v432, %v515
    %v517 = vpop.f32.mrf.mxu0
    %v518 = vpop.f32.mrf.mxu0
    %v519 = vadd.f32 %v432, %v518
    %v520 = vpop.f32.mrf.mxu0
    %521 = vmatprep.mubr.bf16.mxu0 0
    %522 = vmatmul.mubr.bf16.gmra.mxu0 %v398
    %v523 = vpop.f32.mrf.mxu0
    %v524 = vadd.f32 %v432, %v523
    %v525 = vpop.f32.mrf.mxu0
    %v526 = vpop.f32.mrf.mxu0
    %v527 = vadd.f32 %v432, %v526
    %v528 = vpop.f32.mrf.mxu0
    %529 = vmatprep.mubr.bf16.mxu0 0
    %530 = vmatmul.mubr.bf16.gmra.mxu0 %v399
    %v531 = vpop.f32.mrf.mxu0
    %v532 = vadd.f32 %v432, %v531
    %v533 = vpop.f32.mrf.mxu0
    %v534 = vpop.f32.mrf.mxu0
    %v535 = vadd.f32 %v432, %v534
    %v536 = vpop.f32.mrf.mxu0
    %537 = vmatprep.mubr.bf16.mxu0 0
    %538 = vmatmul.mubr.bf16.gmra.mxu0 %v400
    %v539 = vpop.f32.mrf.mxu0
    %v540 = vadd.f32 %v432, %v539
    %v541 = vpop.f32.mrf.mxu0
    %v542 = vpop.f32.mrf.mxu0
    %v543 = vadd.f32 %v432, %v542
    %v544 = vpop.f32.mrf.mxu0
    %545 = vmatprep.mubr.bf16.mxu0 0
    %546 = vmatmul.mubr.bf16.gmra.mxu0 %v401
    %v547 = vpop.f32.mrf.mxu0
    %v548 = vadd.f32 %v432, %v547
    %v549 = vpop.f32.mrf.mxu0
    %v550 = vpop.f32.mrf.mxu0
    %v551 = vadd.f32 %v432, %v550
    %v552 = vpop.f32.mrf.mxu0
    %553 = vmatprep.mubr.bf16.mxu0 0
    %554 = vmatmul.mubr.bf16.gmra.mxu0 %v402
    %v555 = vpop.f32.mrf.mxu0
    %v556 = vadd.f32 %v432, %v555
    %v557 = vpop.f32.mrf.mxu0
    %v558 = vpop.f32.mrf.mxu0
    %v559 = vadd.f32 %v432, %v558
    %v560 = vpop.f32.mrf.mxu0
    %561 = vmatprep.mubr.bf16.mxu0 0
    %562 = vmatmul.mubr.bf16.gmra.mxu0 %v403
    %v563 = vpop.f32.mrf.mxu0
    %v564 = vadd.f32 %v432, %v563
    %v565 = vpop.f32.mrf.mxu0
    %v566 = vpop.f32.mrf.mxu0
    %v567 = vadd.f32 %v432, %v566
    %v568 = vpop.f32.mrf.mxu0
    %569 = vmatprep.mubr.bf16.mxu0 0
    %570 = vmatmul.mubr.bf16.gmra.mxu0 %v404
    %v571 = vpop.f32.mrf.mxu0
    %v572 = vadd.f32 %v432, %v571
    %v573 = vpop.f32.mrf.mxu0
    %v574 = vpop.f32.mrf.mxu0
    %v575 = vadd.f32 %v432, %v574
    %v576 = vpop.f32.mrf.mxu0
    %577 = vmatprep.mubr.bf16.mxu0 0
    %578 = vmatmul.mubr.bf16.gmra.mxu0 %v405
    %v579 = vpop.f32.mrf.mxu0
    %v580 = vadd.f32 %v432, %v579
    %v581 = vpop.f32.mrf.mxu0
    %v582 = vpop.f32.mrf.mxu0
    %v583 = vadd.f32 %v432, %v582
    %v584 = vpop.f32.mrf.mxu0
    %585 = vmatprep.mubr.bf16.mxu0 0
    %586 = vmatmul.mubr.bf16.gmra.mxu0 %v406
    %v587 = vpop.f32.mrf.mxu0
    %v588 = vadd.f32 %v432, %v587
    %v589 = vpop.f32.mrf.mxu0
    %v590 = vpop.f32.mrf.mxu0
    %v591 = vadd.f32 %v432, %v590
    %v592 = vpop.f32.mrf.mxu0
    %593 = vmatprep.mubr.bf16.mxu0 0
    %594 = vmatmul.mubr.bf16.gmra.mxu0 %v407
    %v595 = vpop.f32.mrf.mxu0
    %v596 = vadd.f32 %v432, %v595
    %v597 = vpop.f32.mrf.mxu0
    %v598 = vpop.f32.mrf.mxu0
    %v599 = vadd.f32 %v432, %v598
    %v600 = vpop.f32.mrf.mxu0
    %601 = vmatprep.mubr.bf16.mxu0 0
    %602 = vmatmul.mubr.bf16.gmra.mxu0 %v408
    %v603 = vpop.f32.mrf.mxu0
    %v604 = vadd.f32 %v432, %v603
    %v605 = vpop.f32.mrf.mxu0
    %v606 = vpop.f32.mrf.mxu0
    %v607 = vadd.f32 %v432, %v606
    %v608 = vpop.f32.mrf.mxu0
    %609 = vmatprep.mubr.bf16.mxu0 0
    %610 = vmatmul.mubr.bf16.gmra.mxu0 %v409
    %v611 = vpop.f32.mrf.mxu0
    %v612 = vadd.f32 %v432, %v611
    %v613 = vpop.f32.mrf.mxu0
    %v614 = vpop.f32.mrf.mxu0
    %v615 = vadd.f32 %v432, %v614
    %v616 = vpop.f32.mrf.mxu0
    %617 = vmatprep.mubr.bf16.mxu0 0
    %618 = vmatmul.mubr.bf16.gmra.mxu0 %v410
    %v619 = vpop.f32.mrf.mxu0
    %v620 = vadd.f32 %v432, %v619
    %v621 = vpop.f32.mrf.mxu0
    %v622 = vpop.f32.mrf.mxu0
    %v623 = vadd.f32 %v432, %v622
    %v624 = vpop.f32.mrf.mxu0
    %625 = vmatprep.mubr.bf16.mxu0 0
    %626 = vmatmul.mubr.bf16.gmra.mxu0 %v411
    %v627 = vpop.f32.mrf.mxu0
    %v628 = vadd.f32 %v432, %v627
    %v629 = vpop.f32.mrf.mxu0
    %v630 = vpop.f32.mrf.mxu0
    %v631 = vadd.f32 %v432, %v630
    %v632 = vpop.f32.mrf.mxu0
    %633 = vmatprep.mubr.bf16.mxu0 0
    %634 = vmatmul.mubr.bf16.gmra.mxu0 %v412
    %v635 = vpop.f32.mrf.mxu0
    %v636 = vadd.f32 %v432, %v635
    %v637 = vpop.f32.mrf.mxu0
    %v638 = vpop.f32.mrf.mxu0
    %v639 = vadd.f32 %v432, %v638
    %v640 = vpop.f32.mrf.mxu0
    %641 = vdwg.mxu0
    %v642 = vmax.f32 %v516, 0.0
    %v643 = vmax.f32 %v519, 0.0
    %v644 = vmax.f32 %v524, 0.0
    %v645 = vmax.f32 %v527, 0.0
    %v646 = vmax.f32 %v532, 0.0
    %v647 = vmax.f32 %v535, 0.0
    %v648 = vmax.f32 %v540, 0.0
    %v649 = vmax.f32 %v543, 0.0
    %v650 = vmax.f32 %v548, 0.0
    %v651 = vmax.f32 %v551, 0.0
    %v652 = vmax.f32 %v556, 0.0
    %v653 = vmax.f32 %v559, 0.0
    %v654 = vmax.f32 %v564, 0.0
    %v655 = vmax.f32 %v567, 0.0
    %v656 = vmax.f32 %v572, 0.0
    %v657 = vmax.f32 %v575, 0.0
    %v658 = vmax.f32 %v580, 0.0
    %v659 = vmax.f32 %v583, 0.0
    %v660 = vmax.f32 %v588, 0.0
    %v661 = vmax.f32 %v591, 0.0
    %v662 = vmax.f32 %v596, 0.0
    %v663 = vmax.f32 %v599, 0.0
    %v664 = vmax.f32 %v604, 0.0
    %v665 = vmax.f32 %v607, 0.0
    %v666 = vmax.f32 %v612, 0.0
    %v667 = vmax.f32 %v615, 0.0
    %v668 = vmax.f32 %v620, 0.0
    %v669 = vmax.f32 %v623, 0.0
    %v670 = vmax.f32 %v628, 0.0
    %v671 = vmax.f32 %v631, 0.0
    %v672 = vmax.f32 %v636, 0.0
    %v673 = vmax.f32 %v639, 0.0
    %v674 = vpack.c.bf16 %v643, %v642
    %v675 = vpack.c.bf16 %v645, %v644
    %v676 = vpack.c.bf16 %v647, %v646
    %v677 = vpack.c.bf16 %v649, %v648
    %v678 = vpack.c.bf16 %v651, %v650
    %v679 = vpack.c.bf16 %v653, %v652
    %v680 = vpack.c.bf16 %v655, %v654
    %v681 = vpack.c.bf16 %v657, %v656
    %v682 = vpack.c.bf16 %v659, %v658
    %v683 = vpack.c.bf16 %v661, %v660
    %v684 = vpack.c.bf16 %v663, %v662
    %v685 = vpack.c.bf16 %v665, %v664
    %v686 = vpack.c.bf16 %v667, %v666
    %v687 = vpack.c.bf16 %v669, %v668
    %v688 = vpack.c.bf16 %v671, %v670
    %v689 = vpack.c.bf16 %v673, %v672
    %v690 = vld [vmem:[%s3] sm:$0xf]
    %v691 = vld [vmem:[%s3 + $0x4] sm:$0xf]
    %v692 = vld [vmem:[%s3 + $0x8] sm:$0xf]
    %v693 = vld [vmem:[%s3 + $0xc] sm:$0xf]
    %v694 = vld [vmem:[%s3 + $0x10] sm:$0xf]
    %v695 = vld [vmem:[%s3 + $0x14] sm:$0xf]
    %v696 = vld [vmem:[%s3 + $0x18] sm:$0xf]
    %v697 = vld [vmem:[%s3 + $0x1c] sm:$0xf]
    %v698 = vld [vmem:[%s3 + $0x20] sm:$0xf]
    %v699 = vld [vmem:[%s3 + $0x24] sm:$0xf]
    %v700 = vld [vmem:[%s3 + $0x28] sm:$0xf]
    %v701 = vld [vmem:[%s3 + $0x2c] sm:$0xf]
    %v702 = vld [vmem:[%s3 + $0x30] sm:$0xf]
    %v703 = vld [vmem:[%s3 + $0x34] sm:$0xf]
    %v704 = vld [vmem:[%s3 + $0x38] sm:$0xf]
    %v705 = vld [vmem:[%s3 + $0x3c] sm:$0xf]
    %v706 = vlaneseq
    %v707 = vshrl.u32 %v706, 7
    %v708 = vsub.s32 2, %v707
    %v709 = vrot.slane %v22, %v708
    %v726 = vunpack.c.l.b16 %v690
    %v727 = vunpack.c.l.b16 %v691
    %v728 = vunpack.c.l.b16 %v692
    %v729 = vunpack.c.l.b16 %v693
    %v730 = vunpack.c.l.b16 %v694
    %v731 = vunpack.c.l.b16 %v695
    %v732 = vunpack.c.l.b16 %v696
    %v733 = vunpack.c.l.b16 %v697
    %v734 = vunpack.c.l.b16 %v698
    %v735 = vunpack.c.l.b16 %v699
    %v736 = vunpack.c.l.b16 %v700
    %v737 = vunpack.c.l.b16 %v701
    %v738 = vunpack.c.l.b16 %v702
    %v739 = vunpack.c.l.b16 %v703
    %v740 = vunpack.c.l.b16 %v704
    %v741 = vunpack.c.l.b16 %v705
    %v742 = vpack.c.b16 %v727, %v726
    %v743 = vpack.c.b16 %v729, %v728
    %v744 = vpack.c.b16 %v731, %v730
    %v745 = vpack.c.b16 %v733, %v732
    %v746 = vpack.c.b16 %v735, %v734
    %v747 = vpack.c.b16 %v737, %v736
    %v748 = vpack.c.b16 %v739, %v738
    %v749 = vpack.c.b16 %v741, %v740
    %758 = vmatprep.subr.bf16.mxu0 0
    %759 = vmatpush1.bf16.msra.mxu0 %v749
    %760 = vmatprep.subr.bf16.mxu0 0
    %761 = vmatpush1.bf16.msra.mxu0 %v748
    %762 = vmatprep.subr.bf16.mxu0 0
    %763 = vmatpush1.bf16.msra.mxu0 %v747
    %764 = vmatprep.subr.bf16.mxu0 0
    %765 = vmatpush1.bf16.msra.mxu0 %v746
    %766 = vmatprep.subr.bf16.mxu0 0
    %767 = vmatpush1.bf16.msra.mxu0 %v745
    %768 = vmatprep.subr.bf16.mxu0 0
    %769 = vmatpush1.bf16.msra.mxu0 %v744
    %770 = vmatprep.subr.bf16.mxu0 0
    %771 = vmatpush1.bf16.msra.mxu0 %v743
    %772 = vmatprep.subr.bf16.mxu0 0
    %773 = vmatpush1.bf16.msra.mxu0 %v742
    %774 = vmatprep.subr.bf16.mxu0 0
    %775 = vmatpush2.bf16.msra.mxu0 0
    %776 = vmatprep.subr.bf16.mxu0 0
    %777 = vmatpush2.bf16.msra.mxu0 0
    %778 = vmatprep.subr.bf16.mxu0 0
    %779 = vmatpush2.bf16.msra.mxu0 0
    %780 = vmatprep.subr.bf16.mxu0 0
    %781 = vmatpush2.bf16.msra.mxu0 0
    %782 = vmatprep.subr.bf16.mxu0 0
    %783 = vmatpush2.bf16.msra.mxu0 0
    %784 = vmatprep.subr.bf16.mxu0 0
    %785 = vmatpush2.bf16.msra.mxu0 0
    %786 = vmatprep.subr.bf16.mxu0 0
    %787 = vmatpush2.bf16.msra.mxu0 0
    %788 = vmatprep.subr.bf16.mxu0 0
    %789 = vmatpush2.bf16.msra.mxu0 0
    %790 = vmatprep.mubr.bf16.mxu0 0
    %791 = vmatmul.mubr.bf16.gmra.mxu0 %v674
    %v792 = vpop.f32.mrf.mxu0
    %v793 = vadd.f32 %v709, %v792
    %v794 = vpop.f32.mrf.mxu0
    %v795 = vpop.f32.mrf.mxu0
    %v796 = vadd.f32 %v709, %v795
    %v797 = vpop.f32.mrf.mxu0
    %798 = vmatprep.mubr.bf16.mxu0 0
    %799 = vmatmul.mubr.bf16.gmra.mxu0 %v675
    %v800 = vpop.f32.mrf.mxu0
    %v801 = vadd.f32 %v709, %v800
    %v802 = vpop.f32.mrf.mxu0
    %v803 = vpop.f32.mrf.mxu0
    %v804 = vadd.f32 %v709, %v803
    %v805 = vpop.f32.mrf.mxu0
    %806 = vmatprep.mubr.bf16.mxu0 0
    %807 = vmatmul.mubr.bf16.gmra.mxu0 %v676
    %v808 = vpop.f32.mrf.mxu0
    %v809 = vadd.f32 %v709, %v808
    %v810 = vpop.f32.mrf.mxu0
    %v811 = vpop.f32.mrf.mxu0
    %v812 = vadd.f32 %v709, %v811
    %v813 = vpop.f32.mrf.mxu0
    %814 = vmatprep.mubr.bf16.mxu0 0
    %815 = vmatmul.mubr.bf16.gmra.mxu0 %v677
    %v816 = vpop.f32.mrf.mxu0
    %v817 = vadd.f32 %v709, %v816
    %v818 = vpop.f32.mrf.mxu0
    %v819 = vpop.f32.mrf.mxu0
    %v820 = vadd.f32 %v709, %v819
    %v821 = vpop.f32.mrf.mxu0
    %822 = vmatprep.mubr.bf16.mxu0 0
    %823 = vmatmul.mubr.bf16.gmra.mxu0 %v678
    %v824 = vpop.f32.mrf.mxu0
    %v825 = vadd.f32 %v709, %v824
    %v826 = vpop.f32.mrf.mxu0
    %v827 = vpop.f32.mrf.mxu0
    %v828 = vadd.f32 %v709, %v827
    %v829 = vpop.f32.mrf.mxu0
    %830 = vmatprep.mubr.bf16.mxu0 0
    %831 = vmatmul.mubr.bf16.gmra.mxu0 %v679
    %v832 = vpop.f32.mrf.mxu0
    %v833 = vadd.f32 %v709, %v832
    %v834 = vpop.f32.mrf.mxu0
    %v835 = vpop.f32.mrf.mxu0
    %v836 = vadd.f32 %v709, %v835
    %v837 = vpop.f32.mrf.mxu0
    %838 = vmatprep.mubr.bf16.mxu0 0
    %839 = vmatmul.mubr.bf16.gmra.mxu0 %v680
    %v840 = vpop.f32.mrf.mxu0
    %v841 = vadd.f32 %v709, %v840
    %v842 = vpop.f32.mrf.mxu0
    %v843 = vpop.f32.mrf.mxu0
    %v844 = vadd.f32 %v709, %v843
    %v845 = vpop.f32.mrf.mxu0
    %846 = vmatprep.mubr.bf16.mxu0 0
    %847 = vmatmul.mubr.bf16.gmra.mxu0 %v681
    %v848 = vpop.f32.mrf.mxu0
    %v849 = vadd.f32 %v709, %v848
    %v850 = vpop.f32.mrf.mxu0
    %v851 = vpop.f32.mrf.mxu0
    %v852 = vadd.f32 %v709, %v851
    %v853 = vpop.f32.mrf.mxu0
    %854 = vmatprep.mubr.bf16.mxu0 0
    %855 = vmatmul.mubr.bf16.gmra.mxu0 %v682
    %v856 = vpop.f32.mrf.mxu0
    %v857 = vadd.f32 %v709, %v856
    %v858 = vpop.f32.mrf.mxu0
    %v859 = vpop.f32.mrf.mxu0
    %v860 = vadd.f32 %v709, %v859
    %v861 = vpop.f32.mrf.mxu0
    %862 = vmatprep.mubr.bf16.mxu0 0
    %863 = vmatmul.mubr.bf16.gmra.mxu0 %v683
    %v864 = vpop.f32.mrf.mxu0
    %v865 = vadd.f32 %v709, %v864
    %v866 = vpop.f32.mrf.mxu0
    %v867 = vpop.f32.mrf.mxu0
    %v868 = vadd.f32 %v709, %v867
    %v869 = vpop.f32.mrf.mxu0
    %870 = vmatprep.mubr.bf16.mxu0 0
    %871 = vmatmul.mubr.bf16.gmra.mxu0 %v684
    %v872 = vpop.f32.mrf.mxu0
    %v873 = vadd.f32 %v709, %v872
    %v874 = vpop.f32.mrf.mxu0
    %v875 = vpop.f32.mrf.mxu0
    %v876 = vadd.f32 %v709, %v875
    %v877 = vpop.f32.mrf.mxu0
    %878 = vmatprep.mubr.bf16.mxu0 0
    %879 = vmatmul.mubr.bf16.gmra.mxu0 %v685
    %v880 = vpop.f32.mrf.mxu0
    %v881 = vadd.f32 %v709, %v880
    %v882 = vpop.f32.mrf.mxu0
    %v883 = vpop.f32.mrf.mxu0
    %v884 = vadd.f32 %v709, %v883
    %v885 = vpop.f32.mrf.mxu0
    %886 = vmatprep.mubr.bf16.mxu0 0
    %887 = vmatmul.mubr.bf16.gmra.mxu0 %v686
    %v888 = vpop.f32.mrf.mxu0
    %v889 = vadd.f32 %v709, %v888
    %v890 = vpop.f32.mrf.mxu0
    %v891 = vpop.f32.mrf.mxu0
    %v892 = vadd.f32 %v709, %v891
    %v893 = vpop.f32.mrf.mxu0
    %894 = vmatprep.mubr.bf16.mxu0 0
    %895 = vmatmul.mubr.bf16.gmra.mxu0 %v687
    %v896 = vpop.f32.mrf.mxu0
    %v897 = vadd.f32 %v709, %v896
    %v898 = vpop.f32.mrf.mxu0
    %v899 = vpop.f32.mrf.mxu0
    %v900 = vadd.f32 %v709, %v899
    %v901 = vpop.f32.mrf.mxu0
    %902 = vmatprep.mubr.bf16.mxu0 0
    %903 = vmatmul.mubr.bf16.gmra.mxu0 %v688
    %v904 = vpop.f32.mrf.mxu0
    %v905 = vadd.f32 %v709, %v904
    %v906 = vpop.f32.mrf.mxu0
    %v907 = vpop.f32.mrf.mxu0
    %v908 = vadd.f32 %v709, %v907
    %v909 = vpop.f32.mrf.mxu0
    %910 = vmatprep.mubr.bf16.mxu0 0
    %911 = vmatmul.mubr.bf16.gmra.mxu0 %v689
    %v912 = vpop.f32.mrf.mxu0
    %v913 = vadd.f32 %v709, %v912
    %v914 = vpop.f32.mrf.mxu0
    %v915 = vpop.f32.mrf.mxu0
    %v916 = vadd.f32 %v709, %v915
    %v917 = vpop.f32.mrf.mxu0
    %918 = vdwg.mxu0
    %919 = vxpose.xlu0.b32.start [1/16] %v793, 128
    %920 = vxpose.xlu0.b32.cont [2/16] %v796, 128
    %921 = vxpose.xlu0.b32.cont [3/16] %v801, 128
    %922 = vxpose.xlu0.b32.cont [4/16] %v804, 128
    %923 = vxpose.xlu0.b32.cont [5/16] %v809, 128
    %924 = vxpose.xlu0.b32.cont [6/16] %v812, 128
    %925 = vxpose.xlu0.b32.cont [7/16] %v817, 128
    %926 = vxpose.xlu0.b32.cont [8/16] %v820, 128
    %927 = vxpose.xlu0.b32.cont [9/16] %v825, 128
    %928 = vxpose.xlu0.b32.cont [10/16] %v828, 128
    %929 = vxpose.xlu0.b32.cont [11/16] %v833, 128
    %930 = vxpose.xlu0.b32.cont [12/16] %v836, 128
    %931 = vxpose.xlu0.b32.cont [13/16] %v841, 128
    %932 = vxpose.xlu0.b32.cont [14/16] %v844, 128
    %933 = vxpose.xlu0.b32.cont [15/16] %v849, 128
    %934 = vxpose.xlu0.b32.end [16/16] %v852, 128
    %v935 = vpop.trf.xlu0
    %v936 = vpop.trf.xlu0
    %v937 = vpop.trf.xlu0
    %v938 = vpop.trf.xlu0
    %v939 = vpop.trf.xlu0
    %v940 = vpop.trf.xlu0
    %v941 = vpop.trf.xlu0
    %v942 = vpop.trf.xlu0
    %v943 = vpop.trf.xlu0
    %v944 = vpop.trf.xlu0
    %v945 = vpop.trf.xlu0
    %v946 = vpop.trf.xlu0
    %v947 = vpop.trf.xlu0
    %v948 = vpop.trf.xlu0
    %v949 = vpop.trf.xlu0
    %v950 = vpop.trf.xlu0
    %951 = vxpose.xlu0.b32.start [1/16] %v857, 128
    %952 = vxpose.xlu0.b32.cont [2/16] %v860, 128
    %953 = vxpose.xlu0.b32.cont [3/16] %v865, 128
    %954 = vxpose.xlu0.b32.cont [4/16] %v868, 128
    %955 = vxpose.xlu0.b32.cont [5/16] %v873, 128
    %956 = vxpose.xlu0.b32.cont [6/16] %v876, 128
    %957 = vxpose.xlu0.b32.cont [7/16] %v881, 128
    %958 = vxpose.xlu0.b32.cont [8/16] %v884, 128
    %959 = vxpose.xlu0.b32.cont [9/16] %v889, 128
    %960 = vxpose.xlu0.b32.cont [10/16] %v892, 128
    %961 = vxpose.xlu0.b32.cont [11/16] %v897, 128
    %962 = vxpose.xlu0.b32.cont [12/16] %v900, 128
    %963 = vxpose.xlu0.b32.cont [13/16] %v905, 128
    %964 = vxpose.xlu0.b32.cont [14/16] %v908, 128
    %965 = vxpose.xlu0.b32.cont [15/16] %v913, 128
    %966 = vxpose.xlu0.b32.end [16/16] %v916, 128
    %v967 = vpop.trf.xlu0
    %v968 = vpop.trf.xlu0
    %v969 = vpop.trf.xlu0
    %v970 = vpop.trf.xlu0
    %v971 = vpop.trf.xlu0
    %v972 = vpop.trf.xlu0
    %v973 = vpop.trf.xlu0
    %v974 = vpop.trf.xlu0
    %v975 = vpop.trf.xlu0
    %v976 = vpop.trf.xlu0
    %v977 = vpop.trf.xlu0
    %v978 = vpop.trf.xlu0
    %v979 = vpop.trf.xlu0
    %v980 = vpop.trf.xlu0
    %v981 = vpop.trf.xlu0
    %v982 = vpop.trf.xlu0
    %983 = vst [vmem:[#allocation2] sm:$0xff] %v935
    %984 = vst [vmem:[#allocation2 + $0x8] sm:$0xff] %v967
    // Predicated region
    $region22: #{tpu_custom_call.1} parent=1 // pred_check
      _
    $region23: #{tpu_custom_call.1} parent=1 // pred_check_branch
      %986 = sbr.rel (0) target = $region25
    $region24: #{tpu_custom_call.1} parent=1 // pred_region
      %s988 = ssub.s32 256, 256
      %989 = vsyncadd [#allocation3], %s988
      %s991 = sshll.u32 [#allocation2], 4
      %s992 = int_to_ptr.vmem [resolvable:$true] %s991
      %994 = dma.vmem_to_hbm [thread:$0]  %s992, 256, %s5, [#allocation3]
    $region25: #{tpu_custom_call.1} parent=1 // pred_fallthru
      _
    // Predicated region
    $region26: #{tpu_custom_call.1} parent=1 // pred_check
      _
    $region27: #{tpu_custom_call.1} parent=1 // pred_check_branch
      %996 = sbr.rel (0) target = $region29
    $region28: #{tpu_custom_call.1} parent=1 // pred_region
      %997 = dma.done [#allocation3], 256
    $region29: #{tpu_custom_call.1} parent=1 // pred_fallthru
      _
    %998 = vsyncpa [#allocation3], 1

</llo_original>
